<compile_context>
chip_gen: v7x
topology: tpu7x:2x2x1
jax: 0.10.0
libtpu: 0.0.40
codegen_flags: <defaults>
</compile_context>

<pallas_src>
from dataclasses import dataclass
from functools import partial

import jax
import jax.numpy as jnp
from jax import lax
from jax.experimental import pallas as pl
from jax.experimental.pallas import tpu as pltpu

EPS = 1e-5                    # LayerNorm epsilon (matches reference LayerNorm)
GELU_C = 0.7978845608028654   # sqrt(2/pi), GPT-2 tanh-approx GELU
MAX_ROW_TILE = 512            # max row tile for the [B*T, *] fused kernels
WEIGHT_VMEM_BUDGET = 8 * 1024 * 1024   # per-step weight-block budget (bytes)


# ------------------------------ small helpers ------------------------------

def _round_up(x, m):
    return (x + m - 1) // m * m


_VMEM_LIMIT = None


def _vmem_limit_bytes():
    """Generation-dependent scoped-VMEM limit (~7/8 of capacity, capped)."""
    global _VMEM_LIMIT
    if _VMEM_LIMIT is None:
        cap = None
        try:
            info = pltpu.get_tpu_info()
            cap = getattr(info, "vmem_capacity_bytes", None)
        except Exception:
            cap = None
        if not cap:
            cap = 64 * 1024 * 1024            # conservative (v7x-sized) fallback
        _VMEM_LIMIT = int(min(cap * 7 // 8, 112 * 1024 * 1024))
    return _VMEM_LIMIT


def _cp(*semantics):
    return pltpu.CompilerParams(
        dimension_semantics=semantics,
        vmem_limit_bytes=_vmem_limit_bytes(),
    )


_SINGLE_BUFFER_OK = None


def _probe_single_buffer():
    """One-time eager probe: is pipeline_mode=pl.Buffered(1) supported?"""
    global _SINGLE_BUFFER_OK
    if _SINGLE_BUFFER_OK is not None:
        return _SINGLE_BUFFER_OK

    def _copy_kernel(x_ref, o_ref):
        o_ref[...] = x_ref[...]

    try:
        x = jnp.zeros((8, 128), jnp.float32)
        y = pl.pallas_call(
            _copy_kernel,
            out_shape=jax.ShapeDtypeStruct((8, 128), jnp.float32),
            grid=(1,),
            in_specs=[pl.BlockSpec((8, 128), lambda i: (0, 0),
                                   pipeline_mode=pl.Buffered(buffer_count=1))],
            out_specs=pl.BlockSpec((8, 128), lambda i: (0, 0)),
        )(x)
        jax.block_until_ready(y)
        _SINGLE_BUFFER_OK = True
    except Exception:
        _SINGLE_BUFFER_OK = False
    return _SINGLE_BUFFER_OK


def _spec(shape, index_map, *, constant=False):
    """BlockSpec; constant blocks (same block at every grid step) get a single
    VMEM buffer instead of the default double buffer (halves weight VMEM)."""
    if constant and _probe_single_buffer():
        return pl.BlockSpec(shape, index_map,
                            pipeline_mode=pl.Buffered(buffer_count=1))
    return pl.BlockSpec(shape, index_map)


def _pick_row_tile(M, compute_dtype, max_tile=MAX_ROW_TILE):
    """Largest row tile with small padding waste, aligned to the sublane pack."""
    pack = 16 if jnp.dtype(compute_dtype) == jnp.dtype(jnp.bfloat16) else 8
    if M <= max_tile:
        return _round_up(M, pack)
    candidates = [t for t in (512, 256, 128, 64) if pack <= t <= max_tile]
    for t in candidates:                       # largest tile with <=10% waste
        if _round_up(M, t) - M <= max(pack, M // 10):
            return t
    return min(candidates, key=lambda t: (_round_up(M, t) - M, -t))


def _pick_n_tile(K, N, itemsize, limit=WEIGHT_VMEM_BUDGET):
    """Output-column tile so a (K, nt) weight block stays within budget."""
    if K * N * itemsize <= limit:
        return N
    for t in (1024, 512, 256, 128):
        if N % t == 0 and K * t * itemsize <= limit:
            return t
    return N


def _pick_dh_tile(D, Dh, itemsize, limit=WEIGHT_VMEM_BUDGET):
    """FFN hidden-dim tile so (D, dh)+(dh, D) weight blocks stay within budget."""
    if 2 * D * Dh * itemsize <= limit:
        return Dh
    for t in (2048, 1024, 512, 256, 128):
        if Dh % t == 0 and 2 * D * t * itemsize <= limit:
            return t
    return Dh


def _pick_vocab_tile(Vp):
    for t in (512, 256, 128):
        if Vp >= t and Vp % t == 0:
            return t
    return Vp


# ----------------------------- Pallas kernels -----------------------------

def _layernorm_f32(x32, g, b):
    mean = jnp.mean(x32, axis=-1, keepdims=True)
    var = jnp.mean((x32 - mean) ** 2, axis=-1, keepdims=True)   # unbiased=False
    return (x32 - mean) * lax.rsqrt(var + EPS) * g + b


def _ln_matmul_bias_kernel(x_ref, g_ref, b_ref, w_ref, bias_ref, o_ref):
    """out tile = LayerNorm(x) @ w_tile + bias_tile (LN in f32, f32 MXU acc)."""
    x32 = x_ref[...].astype(jnp.float32)
    h = _layernorm_f32(x32, g_ref[...], b_ref[...])
    y = jnp.dot(h.astype(w_ref.dtype), w_ref[...],
                preferred_element_type=jnp.float32) + bias_ref[...]
    o_ref[...] = y.astype(o_ref.dtype)


def _proj_residual_kernel(resid_ref, x_ref, w_ref, bias_ref, o_ref):
    """out tile = resid_tile + x @ w_tile + bias_tile (f32 accumulation)."""
    y = jnp.dot(x_ref[...], w_ref[...], preferred_element_type=jnp.float32)
    o_ref[...] = (resid_ref[...].astype(jnp.float32) + y
                  + bias_ref[...]).astype(o_ref.dtype)


def _ln_ffn_residual_kernel(x_ref, g_ref, b_ref, w1_ref, b1_ref,
                            w2_ref, b2_ref, o_ref, ln_ref, acc_ref):
    """out = x + W2(gelu(W1(LayerNorm(x)) + b1)) + b2, hidden dim (Dh) tiled.

    Grid axis 1 runs over Dh tiles ("arbitrary"): LayerNorm(x) is computed once
    into a VMEM scratch at j==0, partial W2 products accumulate into an f32
    scratch, and the residual add + store happen at the last Dh tile.
    """
    j = pl.program_id(1)

    @pl.when(j == 0)
    def _():
        x32 = x_ref[...].astype(jnp.float32)
        ln_ref[...] = _layernorm_f32(x32, g_ref[...], b_ref[...]).astype(ln_ref.dtype)
        acc_ref[...] = jnp.zeros_like(acc_ref)

    h1 = jnp.dot(ln_ref[...], w1_ref[...],
                 preferred_element_type=jnp.float32) + b1_ref[...]
    # GPT-2 GELU (tanh approximation), kept in f32 (no bf16 VPU/EUP on v5e).
    h1 = 0.5 * h1 * (1.0 + jnp.tanh(GELU_C * (h1 + 0.044715 * (h1 ** 3))))
    acc_ref[...] += jnp.dot(h1.astype(w2_ref.dtype), w2_ref[...],
                            preferred_element_type=jnp.float32)

    @pl.when(j == pl.num_programs(1) - 1)
    def _():
        o_ref[...] = (x_ref[...].astype(jnp.float32) + acc_ref[...]
                      + b2_ref[...]).astype(o_ref.dtype)


def _ln_head_kernel(x_ref, g_ref, b_ref, w_ref, o_ref):
    """logits tile = LayerNorm(x) @ w_head_tile (bias-free head, vocab-tiled)."""
    x32 = x_ref[...].astype(jnp.float32)
    h = _layernorm_f32(x32, g_ref[...], b_ref[...])
    o_ref[...] = jnp.dot(h.astype(w_ref.dtype), w_ref[...],
                         preferred_element_type=jnp.float32).astype(o_ref.dtype)


def _attention_kernel(qkv_ref, o_ref, acc_ref, *, n_heads, head_dim,
                      approx_recip, exp_dtype):
    """Causal MHA for one batch element.

    qkv_ref: (T, 3*D) fused QKV activations; o_ref: (T, D) lane-dense output.
    Each head's result is written into a column slice of the (T, D) f32 VMEM
    scratch `acc_ref`, then one dense store hits o_ref (no concatenate copy and
    only one head's temporaries live at a time).
    """
    D = n_heads * head_dim
    qkv = qkv_ref[...]
    T = qkv.shape[0]
    row = lax.broadcasted_iota(jnp.int32, (T, T), 0)
    col = lax.broadcasted_iota(jnp.int32, (T, T), 1)
    causal = col > row
    scale = jnp.asarray(1.0 / (float(head_dim) ** 0.5), qkv.dtype)

    # TODO(synk): for T >~ 1024 / small B, switch to a (batch, head-group) grid
    # with flash-style KV tiling + online softmax (needs a head-major layout);
    # kept per-batch here because toy head_dim < 128 breaks lane-dense per-head
    # blocks.
    for h in range(n_heads):
        lo = h * head_dim
        q = qkv[:, lo:lo + head_dim] * scale                    # pre-scale q
        k = qkv[:, D + lo:D + lo + head_dim]
        v = qkv[:, 2 * D + lo:2 * D + lo + head_dim]
        # q @ k^T without an explicit transpose (contract last dims).
        s = lax.dot_general(q, k, (((1,), (1,)), ((), ())),
                            preferred_element_type=jnp.float32)
        s = jnp.where(causal, -jnp.inf, s)
        m = jnp.max(s, axis=-1, keepdims=True)
        e = jnp.exp((s - m).astype(exp_dtype))     # bf16 exponent on v6e/v7x
        denom = jnp.sum(e, axis=-1, keepdims=True, dtype=jnp.float32)
        if approx_recip:
            inv = pl.reciprocal(denom, approx=True)             # EUP, perf path
        else:
            inv = 1.0 / denom                                   # exact, validation
        w = e * inv.astype(exp_dtype)
        acc_ref[:, lo:lo + head_dim] = jnp.dot(
            w.astype(v.dtype), v, preferred_element_type=jnp.float32)
    o_ref[...] = acc_ref[...].astype(o_ref.dtype)


# ----------------------------- kernel wrappers -----------------------------

def fused_ln_matmul(x2d, gamma, beta, w, bias, row_tile, out_dtype):
    M, K = x2d.shape
    N = w.shape[1]
    nt = _pick_n_tile(K, N, jnp.dtype(w.dtype).itemsize)
    n_n = N // nt
    return pl.pallas_call(
        _ln_matmul_bias_kernel,
        out_shape=jax.ShapeDtypeStruct((M, N), out_dtype),
        grid=(M // row_tile, n_n),
        in_specs=[_spec((row_tile, K), lambda i, j: (i, 0)),
                  _spec((1, K), lambda i, j: (0, 0), constant=True),
                  _spec((1, K), lambda i, j: (0, 0), constant=True),
                  _spec((K, nt), lambda i, j: (0, j), constant=(n_n == 1)),
                  _spec((1, nt), lambda i, j: (0, j), constant=(n_n == 1))],
        out_specs=pl.BlockSpec((row_tile, nt), lambda i, j: (i, j)),
        compiler_params=_cp("parallel", "parallel"),
    )(x2d, gamma, beta, w, bias)


def proj_residual(resid2d, x2d, w, bias, row_tile, out_dtype):
    M, K = x2d.shape
    N = w.shape[1]
    nt = _pick_n_tile(K, N, jnp.dtype(w.dtype).itemsize)
    n_n = N // nt
    return pl.pallas_call(
        _proj_residual_kernel,
        out_shape=jax.ShapeDtypeStruct((M, N), out_dtype),
        grid=(M // row_tile, n_n),
        in_specs=[_spec((row_tile, nt), lambda i, j: (i, j)),
                  _spec((row_tile, K), lambda i, j: (i, 0)),
                  _spec((K, nt), lambda i, j: (0, j), constant=(n_n == 1)),
                  _spec((1, nt), lambda i, j: (0, j), constant=(n_n == 1))],
        out_specs=pl.BlockSpec((row_tile, nt), lambda i, j: (i, j)),
        compiler_params=_cp("parallel", "parallel"),
    )(resid2d, x2d, w, bias)


def ln_ffn_residual(x2d, gamma, beta, w1, b1, w2, b2, row_tile, out_dtype):
    M, D = x2d.shape
    Dh = w1.shape[1]
    dh = _pick_dh_tile(D, Dh, jnp.dtype(w1.dtype).itemsize)
    n_dh = Dh // dh
    return pl.pallas_call(
        _ln_ffn_residual_kernel,
        out_shape=jax.ShapeDtypeStruct((M, D), out_dtype),
        grid=(M // row_tile, n_dh),
        in_specs=[_spec((row_tile, D), lambda i, j: (i, 0)),
                  _spec((1, D), lambda i, j: (0, 0), constant=True),
                  _spec((1, D), lambda i, j: (0, 0), constant=True),
                  _spec((D, dh), lambda i, j: (0, j), constant=(n_dh == 1)),
                  _spec((1, dh), lambda i, j: (0, j), constant=(n_dh == 1)),
                  _spec((dh, D), lambda i, j: (j, 0), constant=(n_dh == 1)),
                  _spec((1, D), lambda i, j: (0, 0), constant=True)],
        out_specs=pl.BlockSpec((row_tile, D), lambda i, j: (i, 0)),
        scratch_shapes=[pltpu.VMEM((row_tile, D), x2d.dtype),     # LayerNorm(x)
                        pltpu.VMEM((row_tile, D), jnp.float32)],  # accumulator
        compiler_params=_cp("parallel", "arbitrary"),
    )(x2d, gamma, beta, w1, b1, w2, b2)


def ln_head(x2d, gamma, beta, w, row_tile):
    M, D = x2d.shape
    Vp = w.shape[1]                      # already padded to a lane-dense width
    vt = _pick_vocab_tile(Vp)
    n_v = Vp // vt
    return pl.pallas_call(
        _ln_head_kernel,
        out_shape=jax.ShapeDtypeStruct((M, Vp), jnp.float32),
        grid=(M // row_tile, n_v),
        in_specs=[_spec((row_tile, D), lambda i, j: (i, 0)),
                  _spec((1, D), lambda i, j: (0, 0), constant=True),
                  _spec((1, D), lambda i, j: (0, 0), constant=True),
                  _spec((D, vt), lambda i, j: (0, j), constant=(n_v == 1))],
        out_specs=pl.BlockSpec((row_tile, vt), lambda i, j: (i, j)),
        compiler_params=_cp("parallel", "parallel"),
    )(x2d, gamma, beta, w)


def causal_attention(qkv, n_heads, approx_recip, softmax_dtype):
    """qkv: (B, T, 3*D) fused projections -> (B, T, D) attention output."""
    B, T, threeD = qkv.shape
    D = threeD // 3
    hd = D // n_heads
    kernel = partial(_attention_kernel, n_heads=n_heads, head_dim=hd,
                     approx_recip=approx_recip, exp_dtype=softmax_dtype)
    return pl.pallas_call(
        kernel,
        out_shape=jax.ShapeDtypeStruct((B, T, D), qkv.dtype),
        grid=(B,),
        in_specs=[pl.BlockSpec((None, T, threeD), lambda b: (b, 0, 0))],
        out_specs=pl.BlockSpec((None, T, D), lambda b: (b, 0, 0)),
        scratch_shapes=[pltpu.VMEM((T, D), jnp.float32)],
        compiler_params=_cp("parallel"),
    )(qkv)


# ------------------------- model config / parameters -------------------------

@dataclass
class GPTConfig:
    vocab_size: int = 64
    context_len: int = 16
    embed_dim: int = 32
    n_heads: int = 4
    n_layers: int = 2
    dropout: float = 0.0     # deterministic forward (identity dropout)
    qkv_bias: bool = True


def init_params(key, cfg: GPTConfig):
    D, V, C = cfg.embed_dim, cfg.vocab_size, cfg.context_len

    def nrm(k, shape, scale=0.02):
        return scale * jax.random.normal(k, shape, dtype=jnp.float32)

    keys = jax.random.split(key, 4 + cfg.n_layers)
    params = dict(
        tok_emb=nrm(keys[0], (V, D)),
        pos_emb=nrm(keys[1], (C, D)),
        lnf_g=jnp.ones((D,), jnp.float32),
        lnf_b=jnp.zeros((D,), jnp.float32),
        w_head=nrm(keys[2], (D, V)),          # out_head: Linear(D, V, bias=False)
        layers=[],
    )
    for l in range(cfg.n_layers):
        lk = jax.random.split(keys[4 + l], 8)
        params["layers"].append(dict(
            ln1_g=jnp.ones((D,), jnp.float32), ln1_b=jnp.zeros((D,), jnp.float32),
            # fused QKV: concat of the three (D, D) torch Linear weights (transposed)
            wqkv=nrm(lk[0], (D, 3 * D)), bqkv=nrm(lk[1], (3 * D,)),
            wo=nrm(lk[2], (D, D)), bo=nrm(lk[3], (D,)),
            ln2_g=jnp.ones((D,), jnp.float32), ln2_b=jnp.zeros((D,), jnp.float32),
            w1=nrm(lk[4], (D, 4 * D)), b1=nrm(lk[5], (4 * D,)),
            w2=nrm(lk[6], (4 * D, D)), b2=nrm(lk[7], (D,)),
        ))
    return params


def prepare_params(params, cfg: GPTConfig, compute_dtype=jnp.float32):
    """One-time parameter prep (call OUTSIDE jit): cast weights to the compute
    dtype, reshape biases/LN params to (1, N) f32, pad the vocab head to a
    lane-dense multiple. Avoids per-forward astype/reshape HBM traffic."""
    _probe_single_buffer()                    # eager probe for Buffered(1)
    cd = jnp.dtype(compute_dtype)
    V = cfg.vocab_size

    def wcast(a):
        return a.astype(cd)

    def row_f32(a):
        return a.reshape(1, -1).astype(jnp.float32)

    pad_unit = 512 if V > 4096 else 128       # real GPT-2 vocab -> 512-wide tiles
    Vp = _round_up(V, pad_unit)
    w_head = params["w_head"]
    if Vp != V:
        w_head = jnp.pad(w_head, ((0, 0), (0, Vp - V)))

    out = dict(
        tok_emb=params["tok_emb"],
        pos_emb=params["pos_emb"],
        lnf_g=row_f32(params["lnf_g"]), lnf_b=row_f32(params["lnf_b"]),
        w_head=wcast(w_head),
        layers=[],
    )
    for lp in params["layers"]:
        out["layers"].append(dict(
            ln1_g=row_f32(lp["ln1_g"]), ln1_b=row_f32(lp["ln1_b"]),
            wqkv=wcast(lp["wqkv"]), bqkv=row_f32(lp["bqkv"]),
            wo=wcast(lp["wo"]), bo=row_f32(lp["bo"]),
            ln2_g=row_f32(lp["ln2_g"]), ln2_b=row_f32(lp["ln2_b"]),
            w1=wcast(lp["w1"]), b1=row_f32(lp["b1"]),
            w2=wcast(lp["w2"]), b2=row_f32(lp["b2"]),
        ))
    return out


# ------------------------------ forward pass ------------------------------

def gpt_forward(prepared, cfg: GPTConfig, tokens,
                approx_softmax=None, softmax_dtype=None):
    """Forward pass using parameters from prepare_params().

    approx_softmax: EUP approximate reciprocal in softmax (default: only for
    bf16 compute). softmax_dtype: dtype of the softmax exponent/weights
    (default bf16 when compute dtype is bf16; pass jnp.float32 on v5e)."""
    compute_dtype = jnp.dtype(prepared["w_head"].dtype)
    if approx_softmax is None:
        approx_softmax = compute_dtype != jnp.dtype(jnp.float32)
    if softmax_dtype is None:
        softmax_dtype = (jnp.bfloat16 if compute_dtype == jnp.dtype(jnp.bfloat16)
                         else jnp.float32)

    B, T = tokens.shape
    D, H, V = cfg.embed_dim, cfg.n_heads, cfg.vocab_size
    M = B * T
    row_tile = _pick_row_tile(M, compute_dtype)
    Mp = _round_up(M, row_tile)                       # padded row count

    # Embedding gather + position add (glue, plain JAX).
    tok = jnp.take(prepared["tok_emb"], tokens.astype(jnp.int32), axis=0)  # (B,T,D)
    pos = prepared["pos_emb"][:T]                                           # (T,D)
    x = (tok + pos[None, :, :]).reshape(M, D).astype(compute_dtype)
    if Mp != M:
        x = jnp.pad(x, ((0, Mp - M), (0, 0)))
    # dropout(p=0.0) == identity

    for lp in prepared["layers"]:
        # --- attention sub-block: fused LN + QKV, MHA, fused proj + residual ---
        qkv = fused_ln_matmul(x, lp["ln1_g"], lp["ln1_b"], lp["wqkv"],
                              lp["bqkv"], row_tile, compute_dtype)        # (Mp,3D)
        qkv = qkv[:M].reshape(B, T, 3 * D)
        ctx = causal_attention(qkv, H, approx_softmax,
                               softmax_dtype).reshape(M, D)               # (M, D)
        if Mp != M:
            ctx = jnp.pad(ctx, ((0, Mp - M), (0, 0)))
        x = proj_residual(x, ctx, lp["wo"], lp["bo"], row_tile, compute_dtype)
        # --- MLP sub-block: fused LN + FFN(GELU) + residual, Dh-tiled ---
        x = ln_ffn_residual(x, lp["ln2_g"], lp["ln2_b"], lp["w1"], lp["b1"],
                            lp["w2"], lp["b2"], row_tile, compute_dtype)

    # final LayerNorm fused into the bias-free vocab head (vocab-tiled, padded)
    logits = ln_head(x, prepared["lnf_g"], prepared["lnf_b"],
                     prepared["w_head"], row_tile)
    return logits[:M, :V].reshape(B, T, V)


# ------------------------- pure-JAX reference (check) -------------------------

def _ln_ref(x, g, b):
    m = x.mean(-1, keepdims=True)
    v = ((x - m) ** 2).mean(-1, keepdims=True)
    return (x - m) / jnp.sqrt(v + EPS) * g + b


def gpt_forward_ref(params, cfg: GPTConfig, tokens):
    B, T = tokens.shape
    D, H = cfg.embed_dim, cfg.n_heads
    hd = D // H
    hi = jax.lax.Precision.HIGHEST
    mm = lambda a, b: jnp.matmul(a, b, precision=hi)

    x = jnp.take(params["tok_emb"], tokens.astype(jnp.int32), axis=0) + \
        params["pos_emb"][:T][None]
    for lp in params["layers"]:
        h = _ln_ref(x, lp["ln1_g"], lp["ln1_b"])
        qkv = mm(h, lp["wqkv"]) + lp["bqkv"]
        q, k, v = jnp.split(qkv, 3, axis=-1)
        sh = lambda t: t.reshape(B, T, H, hd).transpose(0, 2, 1, 3)
        q, k, v = sh(q), sh(k), sh(v)
        s = mm(q, k.transpose(0, 1, 3, 2))
        mask = jnp.triu(jnp.ones((T, T), bool), 1)
        s = jnp.where(mask, -jnp.inf, s) / jnp.sqrt(jnp.float32(hd))
        w = jax.nn.softmax(s, axis=-1)
        ctx = mm(w, v).transpose(0, 2, 1, 3).reshape(B, T, D)
        x = x + (mm(ctx, lp["wo"]) + lp["bo"])
        h = _ln_ref(x, lp["ln2_g"], lp["ln2_b"])
        hh = mm(h, lp["w1"]) + lp["b1"]
        hh = 0.5 * hh * (1.0 + jnp.tanh(GELU_C * (hh + 0.044715 * hh ** 3)))
        x = x + (mm(hh, lp["w2"]) + lp["b2"])
    x = _ln_ref(x, params["lnf_g"], params["lnf_b"])
    return mm(x, params["w_head"])


# ----------------------------------- main -----------------------------------

if __name__ == "__main__":
    cfg = GPTConfig()
    key = jax.random.PRNGKey(0)
    pkey, tkey = jax.random.split(key)
    params = init_params(pkey, cfg)

    B, T = 2, 8
    tokens = jax.random.randint(tkey, (B, T), 0, cfg.vocab_size, dtype=jnp.int32)

    # f32 compute path (validation config: exact softmax reciprocal).
    prep32 = prepare_params(params, cfg, jnp.float32)
    fwd32 = jax.jit(lambda p, t: gpt_forward(p, cfg, t))
    logits = jax.block_until_ready(fwd32(prep32, tokens))
    assert logits.shape == (B, T, cfg.vocab_size)
    assert bool(jnp.isfinite(logits).all())

    ref = gpt_forward_ref(params, cfg, tokens)
    if not bool(jnp.allclose(logits, ref, atol=2e-3, rtol=2e-3)):
        raise AssertionError("Pallas f32 output mismatch vs pure-JAX reference")

    # bf16 compute path (perf config: bf16 MXU operands — also right for v5e —
    # bf16 softmax exponent, EUP approx reciprocal; f32 LN/GELU/accumulation).
    prep16 = prepare_params(params, cfg, jnp.bfloat16)
    fwd16 = jax.jit(lambda p, t: gpt_forward(p, cfg, t))
    logits16 = jax.block_until_ready(fwd16(prep16, tokens)).astype(jnp.float32)
    assert logits16.shape == (B, T, cfg.vocab_size)
    assert bool(jnp.isfinite(logits16).all())
    if not bool(jnp.allclose(logits16, ref, atol=5e-2, rtol=5e-2)):
        raise AssertionError("Pallas bf16 output mismatch vs pure-JAX reference")

    print("KERNEL_OK")
</pallas_src>

<mosaic_0001>
module attributes {stable_mosaic.version = 11 : i64} {
  func.func @_copy_kernel(%arg0: i32, %arg1: memref<8x128xf32, #tpu.memory_space<vmem>>, %arg2: memref<8x128xf32, #tpu.memory_space<vmem>>) attributes {dimension_semantics = [#tpu.dimension_semantics<arbitrary>], iteration_bounds = array<i64: 1>, scalar_prefetch = 0 : i64, scratch_operands = 0 : i64, tpu.core_type = #tpu.core_type<tc>, window_params = [{pipeline_mode = #tpu.pipeline_mode<synchronous>, transform_indices = @transform_0, window_bounds = array<i64: 8, 128>}, {pipeline_mode = #tpu.pipeline_mode<synchronous>, transform_indices = @transform_1, window_bounds = array<i64: 8, 128>}]} {
    %c0 = arith.constant 0 : index
    %c0_0 = arith.constant 0 : index
    %0 = vector.load %arg1[%c0, %c0_0] : memref<8x128xf32, #tpu.memory_space<vmem>>, vector<8x128xf32>
    %c0_1 = arith.constant 0 : index
    %c0_2 = arith.constant 0 : index
    %1 = vector.load %arg2[%c0_1, %c0_2] : memref<8x128xf32, #tpu.memory_space<vmem>>, vector<8x128xf32>
    tpu.vector_store %arg2[%c0_1, %c0_2], %0 {strides = array<i32>} : memref<8x128xf32, #tpu.memory_space<vmem>>, vector<8x128xf32>,
    return
  }
  func.func @transform_0(%arg0: i32) -> (i32, i32) {
    %c0_i32 = arith.constant 0 : i32
    %c0_i32_0 = arith.constant 0 : i32
    %c0_i32_1 = arith.constant 0 : i32
    return %c0_i32, %c0_i32_0 : i32, i32
  }
  func.func @transform_1(%arg0: i32) -> (i32, i32) {
    %c0_i32 = arith.constant 0 : i32
    %c0_i32_0 = arith.constant 0 : i32
    %c0_i32_1 = arith.constant 0 : i32
    return %c0_i32, %c0_i32_0 : i32, i32
  }
}

module attributes {stable_mosaic.version = 11 : i64} {
  func.func @_ln_matmul_bias_kernel(%arg0: i32, %arg1: i32, %arg2: memref<16x32xf32, #tpu.memory_space<vmem>>, %arg3: memref<1x32xf32, #tpu.memory_space<vmem>>, %arg4: memref<1x32xf32, #tpu.memory_space<vmem>>, %arg5: memref<32x96xf32, #tpu.memory_space<vmem>>, %arg6: memref<1x96xf32, #tpu.memory_space<vmem>>, %arg7: memref<16x96xf32, #tpu.memory_space<vmem>>) attributes {dimension_semantics = [#tpu.dimension_semantics<parallel>, #tpu.dimension_semantics<parallel>], iteration_bounds = array<i64: 1, 1>, scalar_prefetch = 0 : i64, scratch_operands = 0 : i64, tpu.core_type = #tpu.core_type<tc>, window_params = [{transform_indices = @transform_0, window_bounds = array<i64: 16, 32>}, {pipeline_mode = #tpu.pipeline_mode<synchronous>, transform_indices = @transform_1, window_bounds = array<i64: 1, 32>}, {pipeline_mode = #tpu.pipeline_mode<synchronous>, transform_indices = @transform_2, window_bounds = array<i64: 1, 32>}, {transform_indices = @transform_3, window_bounds = array<i64: 32, 96>}, {transform_indices = @transform_4, window_bounds = array<i64: 1, 96>}, {transform_indices = @transform_5, window_bounds = array<i64: 16, 96>}]} {
    %c0 = arith.constant 0 : index
    %c0_0 = arith.constant 0 : index
    %0 = vector.load %arg2[%c0, %c0_0] : memref<16x32xf32, #tpu.memory_space<vmem>>, vector<16x32xf32>
    %c0_1 = arith.constant 0 : index
    %c0_2 = arith.constant 0 : index
    %1 = vector.load %arg3[%c0_1, %c0_2] : memref<1x32xf32, #tpu.memory_space<vmem>>, vector<1x32xf32>
    %c0_3 = arith.constant 0 : index
    %c0_4 = arith.constant 0 : index
    %2 = vector.load %arg4[%c0_3, %c0_4] : memref<1x32xf32, #tpu.memory_space<vmem>>, vector<1x32xf32>
    %cst = arith.constant dense<0.000000e+00> : vector<16xf32>
    %3 = vector.multi_reduction <add>, %0, %cst [1] : vector<16x32xf32> to vector<16xf32>
    %4 = vector.shape_cast %3 : vector<16xf32> to vector<16x1xf32>
    %cst_5 = arith.constant 3.200000e+01 : f32
    %5 = vector.broadcast %cst_5 : f32 to vector<16x1xf32>
    %6 = arith.divf %4, %5 : vector<16x1xf32>
    %7 = vector.broadcast %6 : vector<16x1xf32> to vector<16x32xf32>
    %8 = arith.subf %0, %7 : vector<16x32xf32>
    %9 = arith.mulf %8, %8 : vector<16x32xf32>
    %cst_6 = arith.constant dense<0.000000e+00> : vector<16xf32>
    %10 = vector.multi_reduction <add>, %9, %cst_6 [1] : vector<16x32xf32> to vector<16xf32>
    %11 = vector.shape_cast %10 : vector<16xf32> to vector<16x1xf32>
    %cst_7 = arith.constant 3.200000e+01 : f32
    %12 = vector.broadcast %cst_7 : f32 to vector<16x1xf32>
    %13 = arith.divf %11, %12 : vector<16x1xf32>
    %14 = vector.broadcast %6 : vector<16x1xf32> to vector<16x32xf32>
    %15 = arith.subf %0, %14 : vector<16x32xf32>
    %cst_8 = arith.constant 9.99999974E-6 : f32
    %16 = vector.broadcast %cst_8 : f32 to vector<16x1xf32>
    %17 = arith.addf %13, %16 : vector<16x1xf32>
    %18 = math.rsqrt %17 : vector<16x1xf32>
    %19 = vector.broadcast %18 : vector<16x1xf32> to vector<16x32xf32>
    %20 = arith.mulf %15, %19 : vector<16x32xf32>
    %21 = vector.broadcast %1 : vector<1x32xf32> to vector<16x32xf32>
    %22 = arith.mulf %20, %21 : vector<16x32xf32>
    %23 = vector.broadcast %2 : vector<1x32xf32> to vector<16x32xf32>
    %24 = arith.addf %22, %23 : vector<16x32xf32>
    %c0_9 = arith.constant 0 : index
    %c0_10 = arith.constant 0 : index
    %25 = vector.load %arg5[%c0_9, %c0_10] : memref<32x96xf32, #tpu.memory_space<vmem>>, vector<32x96xf32>
    %cst_11 = arith.constant dense<0.000000e+00> : vector<16x96xf32>
    %26 = tpu.matmul %24, %25, %cst_11 {dimension_numbers = #tpu.dot_dimension_numbers<[1], [0], [0], [1], [0, 0, 1, 1], [], []>} : vector<16x32xf32>, vector<32x96xf32>, vector<16x96xf32> -> vector<16x96xf32>
    %c0_12 = arith.constant 0 : index
    %c0_13 = arith.constant 0 : index
    %27 = vector.load %arg6[%c0_12, %c0_13] : memref<1x96xf32, #tpu.memory_space<vmem>>, vector<1x96xf32>
    %28 = vector.broadcast %27 : vector<1x96xf32> to vector<16x96xf32>
    %29 = arith.addf %26, %28 : vector<16x96xf32>
    %c0_14 = arith.constant 0 : index
    %c0_15 = arith.constant 0 : index
    %30 = vector.load %arg7[%c0_14, %c0_15] : memref<16x96xf32, #tpu.memory_space<vmem>>, vector<16x96xf32>
    tpu.vector_store %arg7[%c0_14, %c0_15], %29 {strides = array<i32>} : memref<16x96xf32, #tpu.memory_space<vmem>>, vector<16x96xf32>,
    return
  }
  func.func @transform_0(%arg0: i32, %arg1: i32) -> (i32, i32) {
    %c0_i32 = arith.constant 0 : i32
    %c0_i32_0 = arith.constant 0 : i32
    return %arg0, %c0_i32 : i32, i32
  }
  func.func @transform_1(%arg0: i32, %arg1: i32) -> (i32, i32) {
    %c0_i32 = arith.constant 0 : i32
    %c0_i32_0 = arith.constant 0 : i32
    %c0_i32_1 = arith.constant 0 : i32
    return %c0_i32, %c0_i32_0 : i32, i32
  }
  func.func @transform_2(%arg0: i32, %arg1: i32) -> (i32, i32) {
    %c0_i32 = arith.constant 0 : i32
    %c0_i32_0 = arith.constant 0 : i32
    %c0_i32_1 = arith.constant 0 : i32
    return %c0_i32, %c0_i32_0 : i32, i32
  }
  func.func @transform_3(%arg0: i32, %arg1: i32) -> (i32, i32) {
    %c0_i32 = arith.constant 0 : i32
    %c0_i32_0 = arith.constant 0 : i32
    return %c0_i32, %arg1 : i32, i32
  }
  func.func @transform_4(%arg0: i32, %arg1: i32) -> (i32, i32) {
    %c0_i32 = arith.constant 0 : i32
    %c0_i32_0 = arith.constant 0 : i32
    return %c0_i32, %arg1 : i32, i32
  }
  func.func @transform_5(%arg0: i32, %arg1: i32) -> (i32, i32) {
    %c0_i32 = arith.constant 0 : i32
    return %arg0, %arg1 : i32, i32
  }
}

module attributes {stable_mosaic.version = 11 : i64} {
  func.func @_attention_kernel(%arg0: i32, %arg1: memref<1x8x96xf32, #tpu.memory_space<vmem>>, %arg2: memref<1x8x32xf32, #tpu.memory_space<vmem>>, %arg3: memref<8x32xf32, #tpu.memory_space<vmem>>) attributes {dimension_semantics = [#tpu.dimension_semantics<parallel>], iteration_bounds = array<i64: 2>, scalar_prefetch = 0 : i64, scratch_operands = 1 : i64, tpu.core_type = #tpu.core_type<tc>, window_params = [{transform_indices = @transform_0, window_bounds = array<i64: 1, 8, 96>}, {transform_indices = @transform_1, window_bounds = array<i64: 1, 8, 32>}]} {
    %c0 = arith.constant 0 : index
    %c0_0 = arith.constant 0 : index
    %c0_1 = arith.constant 0 : index
    %0 = vector.load %arg1[%c0, %c0_0, %c0_1] : memref<1x8x96xf32, #tpu.memory_space<vmem>>, vector<1x8x96xf32>
    %1 = vector.shape_cast %0 : vector<1x8x96xf32> to vector<8x96xf32>
    %2 = tpu.iota {dimensions = array<i32: 0>} : vector<8x8xi32>
    %3 = tpu.iota {dimensions = array<i32: 1>} : vector<8x8xi32>
    %4 = arith.cmpi sgt, %3, %2 : vector<8x8xi32>
    %5 = vector.extract_strided_slice %1 {offsets = [0, 0], sizes = [8, 8], strides = [1, 1]} : vector<8x96xf32> to vector<8x8xf32>
    %cst = arith.constant 0.353553385 : f32
    %6 = vector.broadcast %cst : f32 to vector<8x8xf32>
    %7 = arith.mulf %5, %6 : vector<8x8xf32>
    %8 = vector.extract_strided_slice %1 {offsets = [0, 32], sizes = [8, 8], strides = [1, 1]} : vector<8x96xf32> to vector<8x8xf32>
    %9 = vector.extract_strided_slice %1 {offsets = [0, 64], sizes = [8, 8], strides = [1, 1]} : vector<8x96xf32> to vector<8x8xf32>
    %cst_2 = arith.constant dense<0.000000e+00> : vector<8x8xf32>
    %10 = tpu.matmul %7, %8, %cst_2 {dimension_numbers = #tpu.dot_dimension_numbers<[1], [1], [0], [0], [0, 0, 1, 0], [], []>} : vector<8x8xf32>, vector<8x8xf32>, vector<8x8xf32> -> vector<8x8xf32>
    %cst_3 = arith.constant 0xFF800000 : f32
    %11 = vector.broadcast %cst_3 : f32 to vector<8x8xf32>
    %12 = arith.select %4, %11, %10 : vector<8x8xi1>, vector<8x8xf32>
    %cst_4 = arith.constant dense<0xFF800000> : vector<8xf32>
    %13 = vector.multi_reduction <maximumf>, %12, %cst_4 [1] : vector<8x8xf32> to vector<8xf32>
    %14 = vector.shape_cast %13 : vector<8xf32> to vector<8x1xf32>
    %15 = vector.broadcast %14 : vector<8x1xf32> to vector<8x8xf32>
    %16 = arith.subf %12, %15 : vector<8x8xf32>
    %17 = math.exp %16 : vector<8x8xf32>
    %cst_5 = arith.constant dense<0.000000e+00> : vector<8xf32>
    %18 = vector.multi_reduction <add>, %17, %cst_5 [1] : vector<8x8xf32> to vector<8xf32>
    %19 = vector.shape_cast %18 : vector<8xf32> to vector<8x1xf32>
    %cst_6 = arith.constant 1.000000e+00 : f32
    %20 = vector.broadcast %cst_6 : f32 to vector<8x1xf32>
    %21 = arith.divf %20, %19 : vector<8x1xf32>
    %22 = vector.broadcast %21 : vector<8x1xf32> to vector<8x8xf32>
    %23 = arith.mulf %17, %22 : vector<8x8xf32>
    %cst_7 = arith.constant dense<0.000000e+00> : vector<8x8xf32>
    %24 = tpu.matmul %23, %9, %cst_7 {dimension_numbers = #tpu.dot_dimension_numbers<[1], [0], [0], [1], [0, 0, 1, 1], [], []>} : vector<8x8xf32>, vector<8x8xf32>, vector<8x8xf32> -> vector<8x8xf32>
    %c0_8 = arith.constant 0 : index
    %c0_9 = arith.constant 0 : index
    %25 = vector.load %arg3[%c0_8, %c0_9] : memref<8x32xf32, #tpu.memory_space<vmem>>, vector<8x8xf32>
    tpu.vector_store %arg3[%c0_8, %c0_9], %24 {strides = array<i32>} : memref<8x32xf32, #tpu.memory_space<vmem>>, vector<8x8xf32>,
    %26 = vector.extract_strided_slice %1 {offsets = [0, 8], sizes = [8, 8], strides = [1, 1]} : vector<8x96xf32> to vector<8x8xf32>
    %cst_10 = arith.constant 0.353553385 : f32
    %27 = vector.broadcast %cst_10 : f32 to vector<8x8xf32>
    %28 = arith.mulf %26, %27 : vector<8x8xf32>
    %29 = vector.extract_strided_slice %1 {offsets = [0, 40], sizes = [8, 8], strides = [1, 1]} : vector<8x96xf32> to vector<8x8xf32>
    %30 = vector.extract_strided_slice %1 {offsets = [0, 72], sizes = [8, 8], strides = [1, 1]} : vector<8x96xf32> to vector<8x8xf32>
    %cst_11 = arith.constant dense<0.000000e+00> : vector<8x8xf32>
    %31 = tpu.matmul %28, %29, %cst_11 {dimension_numbers = #tpu.dot_dimension_numbers<[1], [1], [0], [0], [0, 0, 1, 0], [], []>} : vector<8x8xf32>, vector<8x8xf32>, vector<8x8xf32> -> vector<8x8xf32>
    %cst_12 = arith.constant 0xFF800000 : f32
    %32 = vector.broadcast %cst_12 : f32 to vector<8x8xf32>
    %33 = arith.select %4, %32, %31 : vector<8x8xi1>, vector<8x8xf32>
    %cst_13 = arith.constant dense<0xFF800000> : vector<8xf32>
    %34 = vector.multi_reduction <maximumf>, %33, %cst_13 [1] : vector<8x8xf32> to vector<8xf32>
    %35 = vector.shape_cast %34 : vector<8xf32> to vector<8x1xf32>
    %36 = vector.broadcast %35 : vector<8x1xf32> to vector<8x8xf32>
    %37 = arith.subf %33, %36 : vector<8x8xf32>
    %38 = math.exp %37 : vector<8x8xf32>
    %cst_14 = arith.constant dense<0.000000e+00> : vector<8xf32>
    %39 = vector.multi_reduction <add>, %38, %cst_14 [1] : vector<8x8xf32> to vector<8xf32>
    %40 = vector.shape_cast %39 : vector<8xf32> to vector<8x1xf32>
    %cst_15 = arith.constant 1.000000e+00 : f32
    %41 = vector.broadcast %cst_15 : f32 to vector<8x1xf32>
    %42 = arith.divf %41, %40 : vector<8x1xf32>
    %43 = vector.broadcast %42 : vector<8x1xf32> to vector<8x8xf32>
    %44 = arith.mulf %38, %43 : vector<8x8xf32>
    %cst_16 = arith.constant dense<0.000000e+00> : vector<8x8xf32>
    %45 = tpu.matmul %44, %30, %cst_16 {dimension_numbers = #tpu.dot_dimension_numbers<[1], [0], [0], [1], [0, 0, 1, 1], [], []>} : vector<8x8xf32>, vector<8x8xf32>, vector<8x8xf32> -> vector<8x8xf32>
    %c0_17 = arith.constant 0 : index
    %c8 = arith.constant 8 : index
    %46 = vector.load %arg3[%c0_17, %c8] : memref<8x32xf32, #tpu.memory_space<vmem>>, vector<8x8xf32>
    tpu.vector_store %arg3[%c0_17, %c8], %45 {strides = array<i32>} : memref<8x32xf32, #tpu.memory_space<vmem>>, vector<8x8xf32>,
    %47 = vector.extract_strided_slice %1 {offsets = [0, 16], sizes = [8, 8], strides = [1, 1]} : vector<8x96xf32> to vector<8x8xf32>
    %cst_18 = arith.constant 0.353553385 : f32
    %48 = vector.broadcast %cst_18 : f32 to vector<8x8xf32>
    %49 = arith.mulf %47, %48 : vector<8x8xf32>
    %50 = vector.extract_strided_slice %1 {offsets = [0, 48], sizes = [8, 8], strides = [1, 1]} : vector<8x96xf32> to vector<8x8xf32>
    %51 = vector.extract_strided_slice %1 {offsets = [0, 80], sizes = [8, 8], strides = [1, 1]} : vector<8x96xf32> to vector<8x8xf32>
    %cst_19 = arith.constant dense<0.000000e+00> : vector<8x8xf32>
    %52 = tpu.matmul %49, %50, %cst_19 {dimension_numbers = #tpu.dot_dimension_numbers<[1], [1], [0], [0], [0, 0, 1, 0], [], []>} : vector<8x8xf32>, vector<8x8xf32>, vector<8x8xf32> -> vector<8x8xf32>
    %cst_20 = arith.constant 0xFF800000 : f32
    %53 = vector.broadcast %cst_20 : f32 to vector<8x8xf32>
    %54 = arith.select %4, %53, %52 : vector<8x8xi1>, vector<8x8xf32>
    %cst_21 = arith.constant dense<0xFF800000> : vector<8xf32>
    %55 = vector.multi_reduction <maximumf>, %54, %cst_21 [1] : vector<8x8xf32> to vector<8xf32>
    %56 = vector.shape_cast %55 : vector<8xf32> to vector<8x1xf32>
    %57 = vector.broadcast %56 : vector<8x1xf32> to vector<8x8xf32>
    %58 = arith.subf %54, %57 : vector<8x8xf32>
    %59 = math.exp %58 : vector<8x8xf32>
    %cst_22 = arith.constant dense<0.000000e+00> : vector<8xf32>
    %60 = vector.multi_reduction <add>, %59, %cst_22 [1] : vector<8x8xf32> to vector<8xf32>
    %61 = vector.shape_cast %60 : vector<8xf32> to vector<8x1xf32>
    %cst_23 = arith.constant 1.000000e+00 : f32
    %62 = vector.broadcast %cst_23 : f32 to vector<8x1xf32>
    %63 = arith.divf %62, %61 : vector<8x1xf32>
    %64 = vector.broadcast %63 : vector<8x1xf32> to vector<8x8xf32>
    %65 = arith.mulf %59, %64 : vector<8x8xf32>
    %cst_24 = arith.constant dense<0.000000e+00> : vector<8x8xf32>
    %66 = tpu.matmul %65, %51, %cst_24 {dimension_numbers = #tpu.dot_dimension_numbers<[1], [0], [0], [1], [0, 0, 1, 1], [], []>} : vector<8x8xf32>, vector<8x8xf32>, vector<8x8xf32> -> vector<8x8xf32>
    %c0_25 = arith.constant 0 : index
    %c16 = arith.constant 16 : index
    %67 = vector.load %arg3[%c0_25, %c16] : memref<8x32xf32, #tpu.memory_space<vmem>>, vector<8x8xf32>
    tpu.vector_store %arg3[%c0_25, %c16], %66 {strides = array<i32>} : memref<8x32xf32, #tpu.memory_space<vmem>>, vector<8x8xf32>,
    %68 = vector.extract_strided_slice %1 {offsets = [0, 24], sizes = [8, 8], strides = [1, 1]} : vector<8x96xf32> to vector<8x8xf32>
    %cst_26 = arith.constant 0.353553385 : f32
    %69 = vector.broadcast %cst_26 : f32 to vector<8x8xf32>
    %70 = arith.mulf %68, %69 : vector<8x8xf32>
    %71 = vector.extract_strided_slice %1 {offsets = [0, 56], sizes = [8, 8], strides = [1, 1]} : vector<8x96xf32> to vector<8x8xf32>
    %72 = vector.extract_strided_slice %1 {offsets = [0, 88], sizes = [8, 8], strides = [1, 1]} : vector<8x96xf32> to vector<8x8xf32>
    %cst_27 = arith.constant dense<0.000000e+00> : vector<8x8xf32>
    %73 = tpu.matmul %70, %71, %cst_27 {dimension_numbers = #tpu.dot_dimension_numbers<[1], [1], [0], [0], [0, 0, 1, 0], [], []>} : vector<8x8xf32>, vector<8x8xf32>, vector<8x8xf32> -> vector<8x8xf32>
    %cst_28 = arith.constant 0xFF800000 : f32
    %74 = vector.broadcast %cst_28 : f32 to vector<8x8xf32>
    %75 = arith.select %4, %74, %73 : vector<8x8xi1>, vector<8x8xf32>
    %cst_29 = arith.constant dense<0xFF800000> : vector<8xf32>
    %76 = vector.multi_reduction <maximumf>, %75, %cst_29 [1] : vector<8x8xf32> to vector<8xf32>
    %77 = vector.shape_cast %76 : vector<8xf32> to vector<8x1xf32>
    %78 = vector.broadcast %77 : vector<8x1xf32> to vector<8x8xf32>
    %79 = arith.subf %75, %78 : vector<8x8xf32>
    %80 = math.exp %79 : vector<8x8xf32>
    %cst_30 = arith.constant dense<0.000000e+00> : vector<8xf32>
    %81 = vector.multi_reduction <add>, %80, %cst_30 [1] : vector<8x8xf32> to vector<8xf32>
    %82 = vector.shape_cast %81 : vector<8xf32> to vector<8x1xf32>
    %cst_31 = arith.constant 1.000000e+00 : f32
    %83 = vector.broadcast %cst_31 : f32 to vector<8x1xf32>
    %84 = arith.divf %83, %82 : vector<8x1xf32>
    %85 = vector.broadcast %84 : vector<8x1xf32> to vector<8x8xf32>
    %86 = arith.mulf %80, %85 : vector<8x8xf32>
    %cst_32 = arith.constant dense<0.000000e+00> : vector<8x8xf32>
    %87 = tpu.matmul %86, %72, %cst_32 {dimension_numbers = #tpu.dot_dimension_numbers<[1], [0], [0], [1], [0, 0, 1, 1], [], []>} : vector<8x8xf32>, vector<8x8xf32>, vector<8x8xf32> -> vector<8x8xf32>
    %c0_33 = arith.constant 0 : index
    %c24 = arith.constant 24 : index
    %88 = vector.load %arg3[%c0_33, %c24] : memref<8x32xf32, #tpu.memory_space<vmem>>, vector<8x8xf32>
    tpu.vector_store %arg3[%c0_33, %c24], %87 {strides = array<i32>} : memref<8x32xf32, #tpu.memory_space<vmem>>, vector<8x8xf32>,
    %c0_34 = arith.constant 0 : index
    %c0_35 = arith.constant 0 : index
    %89 = vector.load %arg3[%c0_34, %c0_35] : memref<8x32xf32, #tpu.memory_space<vmem>>, vector<8x32xf32>
    %c0_36 = arith.constant 0 : index
    %c0_37 = arith.constant 0 : index
    %c0_38 = arith.constant 0 : index
    %90 = vector.load %arg2[%c0_36, %c0_37, %c0_38] : memref<1x8x32xf32, #tpu.memory_space<vmem>>, vector<1x8x32xf32>
    %91 = vector.shape_cast %90 : vector<1x8x32xf32> to vector<8x32xf32>
    %92 = vector.shape_cast %89 : vector<8x32xf32> to vector<1x8x32xf32>
    tpu.vector_store %arg2[%c0_36, %c0_37, %c0_38], %92 {strides = array<i32>} : memref<1x8x32xf32, #tpu.memory_space<vmem>>, vector<1x8x32xf32>,
    return
  }
  func.func @transform_0(%arg0: i32) -> (i32, i32, i32) {
    %c0_i32 = arith.constant 0 : i32
    %c0_i32_0 = arith.constant 0 : i32
    %c0_i32_1 = arith.constant 0 : i32
    return %arg0, %c0_i32, %c0_i32_0 : i32, i32, i32
  }
  func.func @transform_1(%arg0: i32) -> (i32, i32, i32) {
    %c0_i32 = arith.constant 0 : i32
    %c0_i32_0 = arith.constant 0 : i32
    %c0_i32_1 = arith.constant 0 : i32
    return %arg0, %c0_i32, %c0_i32_0 : i32, i32, i32
  }
}

module attributes {stable_mosaic.version = 11 : i64} {
  func.func @_proj_residual_kernel(%arg0: i32, %arg1: i32, %arg2: memref<16x32xf32, #tpu.memory_space<vmem>>, %arg3: memref<16x32xf32, #tpu.memory_space<vmem>>, %arg4: memref<32x32xf32, #tpu.memory_space<vmem>>, %arg5: memref<1x32xf32, #tpu.memory_space<vmem>>, %arg6: memref<16x32xf32, #tpu.memory_space<vmem>>) attributes {dimension_semantics = [#tpu.dimension_semantics<parallel>, #tpu.dimension_semantics<parallel>], iteration_bounds = array<i64: 1, 1>, scalar_prefetch = 0 : i64, scratch_operands = 0 : i64, tpu.core_type = #tpu.core_type<tc>, window_params = [{transform_indices = @transform_0, window_bounds = array<i64: 16, 32>}, {transform_indices = @transform_1, window_bounds = array<i64: 16, 32>}, {transform_indices = @transform_2, window_bounds = array<i64: 32, 32>}, {transform_indices = @transform_3, window_bounds = array<i64: 1, 32>}, {transform_indices = @transform_4, window_bounds = array<i64: 16, 32>}]} {
    %c0 = arith.constant 0 : index
    %c0_0 = arith.constant 0 : index
    %0 = vector.load %arg3[%c0, %c0_0] : memref<16x32xf32, #tpu.memory_space<vmem>>, vector<16x32xf32>
    %c0_1 = arith.constant 0 : index
    %c0_2 = arith.constant 0 : index
    %1 = vector.load %arg4[%c0_1, %c0_2] : memref<32x32xf32, #tpu.memory_space<vmem>>, vector<32x32xf32>
    %cst = arith.constant dense<0.000000e+00> : vector<16x32xf32>
    %2 = tpu.matmul %0, %1, %cst {dimension_numbers = #tpu.dot_dimension_numbers<[1], [0], [0], [1], [0, 0, 1, 1], [], []>} : vector<16x32xf32>, vector<32x32xf32>, vector<16x32xf32> -> vector<16x32xf32>
    %c0_3 = arith.constant 0 : index
    %c0_4 = arith.constant 0 : index
    %3 = vector.load %arg2[%c0_3, %c0_4] : memref<16x32xf32, #tpu.memory_space<vmem>>, vector<16x32xf32>
    %4 = arith.addf %3, %2 : vector<16x32xf32>
    %c0_5 = arith.constant 0 : index
    %c0_6 = arith.constant 0 : index
    %5 = vector.load %arg5[%c0_5, %c0_6] : memref<1x32xf32, #tpu.memory_space<vmem>>, vector<1x32xf32>
    %6 = vector.broadcast %5 : vector<1x32xf32> to vector<16x32xf32>
    %7 = arith.addf %4, %6 : vector<16x32xf32>
    %c0_7 = arith.constant 0 : index
    %c0_8 = arith.constant 0 : index
    %8 = vector.load %arg6[%c0_7, %c0_8] : memref<16x32xf32, #tpu.memory_space<vmem>>, vector<16x32xf32>
    tpu.vector_store %arg6[%c0_7, %c0_8], %7 {strides = array<i32>} : memref<16x32xf32, #tpu.memory_space<vmem>>, vector<16x32xf32>,
    return
  }
  func.func @transform_0(%arg0: i32, %arg1: i32) -> (i32, i32) {
    %c0_i32 = arith.constant 0 : i32
    return %arg0, %arg1 : i32, i32
  }
  func.func @transform_1(%arg0: i32, %arg1: i32) -> (i32, i32) {
    %c0_i32 = arith.constant 0 : i32
    %c0_i32_0 = arith.constant 0 : i32
    return %arg0, %c0_i32 : i32, i32
  }
  func.func @transform_2(%arg0: i32, %arg1: i32) -> (i32, i32) {
    %c0_i32 = arith.constant 0 : i32
    %c0_i32_0 = arith.constant 0 : i32
    return %c0_i32, %arg1 : i32, i32
  }
  func.func @transform_3(%arg0: i32, %arg1: i32) -> (i32, i32) {
    %c0_i32 = arith.constant 0 : i32
    %c0_i32_0 = arith.constant 0 : i32
    return %c0_i32, %arg1 : i32, i32
  }
  func.func @transform_4(%arg0: i32, %arg1: i32) -> (i32, i32) {
    %c0_i32 = arith.constant 0 : i32
    return %arg0, %arg1 : i32, i32
  }
}

module attributes {stable_mosaic.version = 11 : i64} {
  func.func @_ln_ffn_residual_kernel(%arg0: i32, %arg1: i32, %arg2: memref<16x32xf32, #tpu.memory_space<vmem>>, %arg3: memref<1x32xf32, #tpu.memory_space<vmem>>, %arg4: memref<1x32xf32, #tpu.memory_space<vmem>>, %arg5: memref<32x128xf32, #tpu.memory_space<vmem>>, %arg6: memref<1x128xf32, #tpu.memory_space<vmem>>, %arg7: memref<128x32xf32, #tpu.memory_space<vmem>>, %arg8: memref<1x32xf32, #tpu.memory_space<vmem>>, %arg9: memref<16x32xf32, #tpu.memory_space<vmem>>, %arg10: memref<16x32xf32, #tpu.memory_space<vmem>>, %arg11: memref<16x32xf32, #tpu.memory_space<vmem>>) attributes {dimension_semantics = [#tpu.dimension_semantics<parallel>, #tpu.dimension_semantics<arbitrary>], iteration_bounds = array<i64: 1, 1>, scalar_prefetch = 0 : i64, scratch_operands = 2 : i64, tpu.core_type = #tpu.core_type<tc>, window_params = [{transform_indices = @transform_0, window_bounds = array<i64: 16, 32>}, {pipeline_mode = #tpu.pipeline_mode<synchronous>, transform_indices = @transform_1, window_bounds = array<i64: 1, 32>}, {pipeline_mode = #tpu.pipeline_mode<synchronous>, transform_indices = @transform_2, window_bounds = array<i64: 1, 32>}, {transform_indices = @transform_3, window_bounds = array<i64: 32, 128>}, {transform_indices = @transform_4, window_bounds = array<i64: 1, 128>}, {transform_indices = @transform_5, window_bounds = array<i64: 128, 32>}, {pipeline_mode = #tpu.pipeline_mode<synchronous>, transform_indices = @transform_6, window_bounds = array<i64: 1, 32>}, {transform_indices = @transform_7, window_bounds = array<i64: 16, 32>}]} {
    %c0_i32 = arith.constant 0 : i32
    %0 = arith.cmpi eq, %arg1, %c0_i32 : i32
    %1 = arith.extui %0 : i1 to i32
    %c0_i32_0 = arith.constant 0 : i32
    %2 = arith.cmpi ne, %1, %c0_i32_0 : i32
    scf.if %2 {
      %c0_19 = arith.constant 0 : index
      %c0_20 = arith.constant 0 : index
      %30 = vector.load %arg2[%c0_19, %c0_20] : memref<16x32xf32, #tpu.memory_space<vmem>>, vector<16x32xf32>
      %c0_21 = arith.constant 0 : index
      %c0_22 = arith.constant 0 : index
      %31 = vector.load %arg3[%c0_21, %c0_22] : memref<1x32xf32, #tpu.memory_space<vmem>>, vector<1x32xf32>
      %c0_23 = arith.constant 0 : index
      %c0_24 = arith.constant 0 : index
      %32 = vector.load %arg4[%c0_23, %c0_24] : memref<1x32xf32, #tpu.memory_space<vmem>>, vector<1x32xf32>
      %cst_25 = arith.constant dense<0.000000e+00> : vector<16xf32>
      %33 = vector.multi_reduction <add>, %30, %cst_25 [1] : vector<16x32xf32> to vector<16xf32>
      %34 = vector.shape_cast %33 : vector<16xf32> to vector<16x1xf32>
      %cst_26 = arith.constant 3.200000e+01 : f32
      %35 = vector.broadcast %cst_26 : f32 to vector<16x1xf32>
      %36 = arith.divf %34, %35 : vector<16x1xf32>
      %37 = vector.broadcast %36 : vector<16x1xf32> to vector<16x32xf32>
      %38 = arith.subf %30, %37 : vector<16x32xf32>
      %39 = arith.mulf %38, %38 : vector<16x32xf32>
      %cst_27 = arith.constant dense<0.000000e+00> : vector<16xf32>
      %40 = vector.multi_reduction <add>, %39, %cst_27 [1] : vector<16x32xf32> to vector<16xf32>
      %41 = vector.shape_cast %40 : vector<16xf32> to vector<16x1xf32>
      %cst_28 = arith.constant 3.200000e+01 : f32
      %42 = vector.broadcast %cst_28 : f32 to vector<16x1xf32>
      %43 = arith.divf %41, %42 : vector<16x1xf32>
      %44 = vector.broadcast %36 : vector<16x1xf32> to vector<16x32xf32>
      %45 = arith.subf %30, %44 : vector<16x32xf32>
      %cst_29 = arith.constant 9.99999974E-6 : f32
      %46 = vector.broadcast %cst_29 : f32 to vector<16x1xf32>
      %47 = arith.addf %43, %46 : vector<16x1xf32>
      %48 = math.rsqrt %47 : vector<16x1xf32>
      %49 = vector.broadcast %48 : vector<16x1xf32> to vector<16x32xf32>
      %50 = arith.mulf %45, %49 : vector<16x32xf32>
      %51 = vector.broadcast %31 : vector<1x32xf32> to vector<16x32xf32>
      %52 = arith.mulf %50, %51 : vector<16x32xf32>
      %53 = vector.broadcast %32 : vector<1x32xf32> to vector<16x32xf32>
      %54 = arith.addf %52, %53 : vector<16x32xf32>
      %c0_30 = arith.constant 0 : index
      %c0_31 = arith.constant 0 : index
      %55 = vector.load %arg10[%c0_30, %c0_31] : memref<16x32xf32, #tpu.memory_space<vmem>>, vector<16x32xf32>
      tpu.vector_store %arg10[%c0_30, %c0_31], %54 {strides = array<i32>} : memref<16x32xf32, #tpu.memory_space<vmem>>, vector<16x32xf32>,
      %cst_32 = arith.constant 0.000000e+00 : f32
      %56 = vector.broadcast %cst_32 : f32 to vector<16x32xf32>
      %c0_33 = arith.constant 0 : index
      %c0_34 = arith.constant 0 : index
      %57 = vector.load %arg11[%c0_33, %c0_34] : memref<16x32xf32, #tpu.memory_space<vmem>>, vector<16x32xf32>
      tpu.vector_store %arg11[%c0_33, %c0_34], %56 {strides = array<i32>} : memref<16x32xf32, #tpu.memory_space<vmem>>, vector<16x32xf32>,
    } else {
    }
    %c0 = arith.constant 0 : index
    %c0_1 = arith.constant 0 : index
    %3 = vector.load %arg10[%c0, %c0_1] : memref<16x32xf32, #tpu.memory_space<vmem>>, vector<16x32xf32>
    %c0_2 = arith.constant 0 : index
    %c0_3 = arith.constant 0 : index
    %4 = vector.load %arg5[%c0_2, %c0_3] : memref<32x128xf32, #tpu.memory_space<vmem>>, vector<32x128xf32>
    %cst = arith.constant dense<0.000000e+00> : vector<16x128xf32>
    %5 = tpu.matmul %3, %4, %cst {dimension_numbers = #tpu.dot_dimension_numbers<[1], [0], [0], [1], [0, 0, 1, 1], [], []>} : vector<16x32xf32>, vector<32x128xf32>, vector<16x128xf32> -> vector<16x128xf32>
    %c0_4 = arith.constant 0 : index
    %c0_5 = arith.constant 0 : index
    %6 = vector.load %arg6[%c0_4, %c0_5] : memref<1x128xf32, #tpu.memory_space<vmem>>, vector<1x128xf32>
    %7 = vector.broadcast %6 : vector<1x128xf32> to vector<16x128xf32>
    %8 = arith.addf %5, %7 : vector<16x128xf32>
    %cst_6 = arith.constant 5.000000e-01 : f32
    %9 = vector.broadcast %cst_6 : f32 to vector<16x128xf32>
    %10 = arith.mulf %9, %8 : vector<16x128xf32>
    %11 = arith.mulf %8, %8 : vector<16x128xf32>
    %12 = arith.mulf %8, %11 : vector<16x128xf32>
    %cst_7 = arith.constant 4.471500e-02 : f32
    %13 = vector.broadcast %cst_7 : f32 to vector<16x128xf32>
    %14 = arith.mulf %13, %12 : vector<16x128xf32>
    %15 = arith.addf %8, %14 : vector<16x128xf32>
    %cst_8 = arith.constant 0.797884583 : f32
    %16 = vector.broadcast %cst_8 : f32 to vector<16x128xf32>
    %17 = arith.mulf %16, %15 : vector<16x128xf32>
    %18 = math.tanh %17 : vector<16x128xf32>
    %cst_9 = arith.constant 1.000000e+00 : f32
    %19 = vector.broadcast %cst_9 : f32 to vector<16x128xf32>
    %20 = arith.addf %19, %18 : vector<16x128xf32>
    %21 = arith.mulf %10, %20 : vector<16x128xf32>
    %c0_10 = arith.constant 0 : index
    %c0_11 = arith.constant 0 : index
    %22 = vector.load %arg11[%c0_10, %c0_11] : memref<16x32xf32, #tpu.memory_space<vmem>>, vector<16x32xf32>
    %c0_12 = arith.constant 0 : index
    %c0_13 = arith.constant 0 : index
    %23 = vector.load %arg7[%c0_12, %c0_13] : memref<128x32xf32, #tpu.memory_space<vmem>>, vector<128x32xf32>
    %cst_14 = arith.constant dense<0.000000e+00> : vector<16x32xf32>
    %24 = tpu.matmul %21, %23, %cst_14 {dimension_numbers = #tpu.dot_dimension_numbers<[1], [0], [0], [1], [0, 0, 1, 1], [], []>} : vector<16x128xf32>, vector<128x32xf32>, vector<16x32xf32> -> vector<16x32xf32>
    %25 = arith.addf %22, %24 : vector<16x32xf32>
    %c0_15 = arith.constant 0 : index
    %c0_16 = arith.constant 0 : index
    %26 = vector.load %arg11[%c0_15, %c0_16] : memref<16x32xf32, #tpu.memory_space<vmem>>, vector<16x32xf32>
    tpu.vector_store %arg11[%c0_15, %c0_16], %25 {strides = array<i32>} : memref<16x32xf32, #tpu.memory_space<vmem>>, vector<16x32xf32>,
    %c0_i32_17 = arith.constant 0 : i32
    %27 = arith.cmpi eq, %arg1, %c0_i32_17 : i32
    %28 = arith.extui %27 : i1 to i32
    %c0_i32_18 = arith.constant 0 : i32
    %29 = arith.cmpi ne, %28, %c0_i32_18 : i32
    scf.if %29 {
      %c0_19 = arith.constant 0 : index
      %c0_20 = arith.constant 0 : index
      %30 = vector.load %arg2[%c0_19, %c0_20] : memref<16x32xf32, #tpu.memory_space<vmem>>, vector<16x32xf32>
      %c0_21 = arith.constant 0 : index
      %c0_22 = arith.constant 0 : index
      %31 = vector.load %arg11[%c0_21, %c0_22] : memref<16x32xf32, #tpu.memory_space<vmem>>, vector<16x32xf32>
      %32 = arith.addf %30, %31 : vector<16x32xf32>
      %c0_23 = arith.constant 0 : index
      %c0_24 = arith.constant 0 : index
      %33 = vector.load %arg8[%c0_23, %c0_24] : memref<1x32xf32, #tpu.memory_space<vmem>>, vector<1x32xf32>
      %34 = vector.broadcast %33 : vector<1x32xf32> to vector<16x32xf32>
      %35 = arith.addf %32, %34 : vector<16x32xf32>
      %c0_25 = arith.constant 0 : index
      %c0_26 = arith.constant 0 : index
      %36 = vector.load %arg9[%c0_25, %c0_26] : memref<16x32xf32, #tpu.memory_space<vmem>>, vector<16x32xf32>
      tpu.vector_store %arg9[%c0_25, %c0_26], %35 {strides = array<i32>} : memref<16x32xf32, #tpu.memory_space<vmem>>, vector<16x32xf32>,
    } else {
    }
    return
  }
  func.func @transform_0(%arg0: i32, %arg1: i32) -> (i32, i32) {
    %c0_i32 = arith.constant 0 : i32
    %c0_i32_0 = arith.constant 0 : i32
    return %arg0, %c0_i32 : i32, i32
  }
  func.func @transform_1(%arg0: i32, %arg1: i32) -> (i32, i32) {
    %c0_i32 = arith.constant 0 : i32
    %c0_i32_0 = arith.constant 0 : i32
    %c0_i32_1 = arith.constant 0 : i32
    return %c0_i32, %c0_i32_0 : i32, i32
  }
  func.func @transform_2(%arg0: i32, %arg1: i32) -> (i32, i32) {
    %c0_i32 = arith.constant 0 : i32
    %c0_i32_0 = arith.constant 0 : i32
    %c0_i32_1 = arith.constant 0 : i32
    return %c0_i32, %c0_i32_0 : i32, i32
  }
  func.func @transform_3(%arg0: i32, %arg1: i32) -> (i32, i32) {
    %c0_i32 = arith.constant 0 : i32
    %c0_i32_0 = arith.constant 0 : i32
    return %c0_i32, %arg1 : i32, i32
  }
  func.func @transform_4(%arg0: i32, %arg1: i32) -> (i32, i32) {
    %c0_i32 = arith.constant 0 : i32
    %c0_i32_0 = arith.constant 0 : i32
    return %c0_i32, %arg1 : i32, i32
  }
  func.func @transform_5(%arg0: i32, %arg1: i32) -> (i32, i32) {
    %c0_i32 = arith.constant 0 : i32
    %c0_i32_0 = arith.constant 0 : i32
    return %arg1, %c0_i32 : i32, i32
  }
  func.func @transform_6(%arg0: i32, %arg1: i32) -> (i32, i32) {
    %c0_i32 = arith.constant 0 : i32
    %c0_i32_0 = arith.constant 0 : i32
    %c0_i32_1 = arith.constant 0 : i32
    return %c0_i32, %c0_i32_0 : i32, i32
  }
  func.func @transform_7(%arg0: i32, %arg1: i32) -> (i32, i32) {
    %c0_i32 = arith.constant 0 : i32
    %c0_i32_0 = arith.constant 0 : i32
    return %arg0, %c0_i32 : i32, i32
  }
}

module attributes {stable_mosaic.version = 11 : i64} {
  func.func @_ln_head_kernel(%arg0: i32, %arg1: i32, %arg2: memref<16x32xf32, #tpu.memory_space<vmem>>, %arg3: memref<1x32xf32, #tpu.memory_space<vmem>>, %arg4: memref<1x32xf32, #tpu.memory_space<vmem>>, %arg5: memref<32x128xf32, #tpu.memory_space<vmem>>, %arg6: memref<16x128xf32, #tpu.memory_space<vmem>>) attributes {dimension_semantics = [#tpu.dimension_semantics<parallel>, #tpu.dimension_semantics<parallel>], iteration_bounds = array<i64: 1, 1>, scalar_prefetch = 0 : i64, scratch_operands = 0 : i64, tpu.core_type = #tpu.core_type<tc>, window_params = [{transform_indices = @transform_0, window_bounds = array<i64: 16, 32>}, {pipeline_mode = #tpu.pipeline_mode<synchronous>, transform_indices = @transform_1, window_bounds = array<i64: 1, 32>}, {pipeline_mode = #tpu.pipeline_mode<synchronous>, transform_indices = @transform_2, window_bounds = array<i64: 1, 32>}, {transform_indices = @transform_3, window_bounds = array<i64: 32, 128>}, {transform_indices = @transform_4, window_bounds = array<i64: 16, 128>}]} {
    %c0 = arith.constant 0 : index
    %c0_0 = arith.constant 0 : index
    %0 = vector.load %arg2[%c0, %c0_0] : memref<16x32xf32, #tpu.memory_space<vmem>>, vector<16x32xf32>
    %c0_1 = arith.constant 0 : index
    %c0_2 = arith.constant 0 : index
    %1 = vector.load %arg3[%c0_1, %c0_2] : memref<1x32xf32, #tpu.memory_space<vmem>>, vector<1x32xf32>
    %c0_3 = arith.constant 0 : index
    %c0_4 = arith.constant 0 : index
    %2 = vector.load %arg4[%c0_3, %c0_4] : memref<1x32xf32, #tpu.memory_space<vmem>>, vector<1x32xf32>
    %cst = arith.constant dense<0.000000e+00> : vector<16xf32>
    %3 = vector.multi_reduction <add>, %0, %cst [1] : vector<16x32xf32> to vector<16xf32>
    %4 = vector.shape_cast %3 : vector<16xf32> to vector<16x1xf32>
    %cst_5 = arith.constant 3.200000e+01 : f32
    %5 = vector.broadcast %cst_5 : f32 to vector<16x1xf32>
    %6 = arith.divf %4, %5 : vector<16x1xf32>
    %7 = vector.broadcast %6 : vector<16x1xf32> to vector<16x32xf32>
    %8 = arith.subf %0, %7 : vector<16x32xf32>
    %9 = arith.mulf %8, %8 : vector<16x32xf32>
    %cst_6 = arith.constant dense<0.000000e+00> : vector<16xf32>
    %10 = vector.multi_reduction <add>, %9, %cst_6 [1] : vector<16x32xf32> to vector<16xf32>
    %11 = vector.shape_cast %10 : vector<16xf32> to vector<16x1xf32>
    %cst_7 = arith.constant 3.200000e+01 : f32
    %12 = vector.broadcast %cst_7 : f32 to vector<16x1xf32>
    %13 = arith.divf %11, %12 : vector<16x1xf32>
    %14 = vector.broadcast %6 : vector<16x1xf32> to vector<16x32xf32>
    %15 = arith.subf %0, %14 : vector<16x32xf32>
    %cst_8 = arith.constant 9.99999974E-6 : f32
    %16 = vector.broadcast %cst_8 : f32 to vector<16x1xf32>
    %17 = arith.addf %13, %16 : vector<16x1xf32>
    %18 = math.rsqrt %17 : vector<16x1xf32>
    %19 = vector.broadcast %18 : vector<16x1xf32> to vector<16x32xf32>
    %20 = arith.mulf %15, %19 : vector<16x32xf32>
    %21 = vector.broadcast %1 : vector<1x32xf32> to vector<16x32xf32>
    %22 = arith.mulf %20, %21 : vector<16x32xf32>
    %23 = vector.broadcast %2 : vector<1x32xf32> to vector<16x32xf32>
    %24 = arith.addf %22, %23 : vector<16x32xf32>
    %c0_9 = arith.constant 0 : index
    %c0_10 = arith.constant 0 : index
    %25 = vector.load %arg5[%c0_9, %c0_10] : memref<32x128xf32, #tpu.memory_space<vmem>>, vector<32x128xf32>
    %cst_11 = arith.constant dense<0.000000e+00> : vector<16x128xf32>
    %26 = tpu.matmul %24, %25, %cst_11 {dimension_numbers = #tpu.dot_dimension_numbers<[1], [0], [0], [1], [0, 0, 1, 1], [], []>} : vector<16x32xf32>, vector<32x128xf32>, vector<16x128xf32> -> vector<16x128xf32>
    %c0_12 = arith.constant 0 : index
    %c0_13 = arith.constant 0 : index
    %27 = vector.load %arg6[%c0_12, %c0_13] : memref<16x128xf32, #tpu.memory_space<vmem>>, vector<16x128xf32>
    tpu.vector_store %arg6[%c0_12, %c0_13], %26 {strides = array<i32>} : memref<16x128xf32, #tpu.memory_space<vmem>>, vector<16x128xf32>,
    return
  }
  func.func @transform_0(%arg0: i32, %arg1: i32) -> (i32, i32) {
    %c0_i32 = arith.constant 0 : i32
    %c0_i32_0 = arith.constant 0 : i32
    return %arg0, %c0_i32 : i32, i32
  }
  func.func @transform_1(%arg0: i32, %arg1: i32) -> (i32, i32) {
    %c0_i32 = arith.constant 0 : i32
    %c0_i32_0 = arith.constant 0 : i32
    %c0_i32_1 = arith.constant 0 : i32
    return %c0_i32, %c0_i32_0 : i32, i32
  }
  func.func @transform_2(%arg0: i32, %arg1: i32) -> (i32, i32) {
    %c0_i32 = arith.constant 0 : i32
    %c0_i32_0 = arith.constant 0 : i32
    %c0_i32_1 = arith.constant 0 : i32
    return %c0_i32, %c0_i32_0 : i32, i32
  }
  func.func @transform_3(%arg0: i32, %arg1: i32) -> (i32, i32) {
    %c0_i32 = arith.constant 0 : i32
    %c0_i32_0 = arith.constant 0 : i32
    return %c0_i32, %arg1 : i32, i32
  }
  func.func @transform_4(%arg0: i32, %arg1: i32) -> (i32, i32) {
    %c0_i32 = arith.constant 0 : i32
    return %arg0, %arg1 : i32, i32
  }
}

</mosaic_0001>

<llo_original>
// kernel: tpu_custom_call.1
$region0: #{tpu_custom_call.1}
  #allocation0 [shape = 'u32[]', space=smem, size = 0x4, offset = 0x4, fixed_abs, tag = 'smem constant byte address 0x4 - core index']
  #allocation1 [shape = 'u32[144,128]{1,0:T(1,128)}', space=vmem, size = 0x12000, scoped, tag = 'internal scratch']
  %s0 = inlined_call_operand.hbm [shape: f32[8,128], index: 0, kind: input, shape index: {}]
  %s1 = inlined_call_operand.hbm [shape: f32[8,128], index: 1, kind: output, shape index: {}]
  %s2 = sld [smem:[#allocation0]]
  $region18: #{tpu_custom_call.1} parent=0
    _
  %s4 = ssub.s32 1, %s2
  %s5 = scalar_select 0, %s4, %s2
  $region1: #{tpu_custom_call.1} parent=0
    #allocation2 [shape = 'u8[4096]{0}', space=vmem, size = 0x1000, scoped, tag = 'input window, operand 0, single buffered']
    #allocation3 [shape = 's32[1]{0}', space=sflag, size = 0x4, scoped, tag = 'scoped memory for tpu_custom_call.1']
    #allocation4 [shape = 's32[1]{0}', space=sflag, size = 0x4, scoped, tag = 'scoped memory for tpu_custom_call.1']
    #allocation5 [shape = 'u8[4096]{0}', space=vmem, size = 0x1000, scoped, tag = 'output window, operand 0, single buffered']
    %6 = vsyncpa [#allocation3], 0
    %7 = vsyncpa [#allocation4], 0
    // Predicated region
    $region2: #{tpu_custom_call.1} parent=1 // pred_check
      _
    $region3: #{tpu_custom_call.1} parent=1 // pred_check_branch
      %9 = sbr.rel (0) target = $region5
    $region4: #{tpu_custom_call.1} parent=1 // pred_region
      %s11 = ssub.s32 128, 128
      %12 = vsyncadd [#allocation3], %s11
      %s14 = sshll.u32 [#allocation2], 4
      %s15 = int_to_ptr.vmem [resolvable:$true] %s14
      %17 = dma.hbm_to_vmem [thread:$0]  %s0, 128, %s15, [#allocation3]
    $region5: #{tpu_custom_call.1} parent=1 // pred_fallthru
      _
    // Predicated region
    $region6: #{tpu_custom_call.1} parent=1 // pred_check
      _
    $region7: #{tpu_custom_call.1} parent=1 // pred_check_branch
      %19 = sbr.rel (0) target = $region9
    $region8: #{tpu_custom_call.1} parent=1 // pred_region
      %20 = dma.done [#allocation3], 128
    $region9: #{tpu_custom_call.1} parent=1 // pred_fallthru
      _
    %v21 = vld [vmem:[#allocation2] sm:$0xff]
    %22 = vst [vmem:[#allocation5] sm:$0xff] %v21
    // Predicated region
    $region10: #{tpu_custom_call.1} parent=1 // pred_check
      _
    $region11: #{tpu_custom_call.1} parent=1 // pred_check_branch
      %24 = sbr.rel (0) target = $region13
    $region12: #{tpu_custom_call.1} parent=1 // pred_region
      %s26 = ssub.s32 128, 128
      %27 = vsyncadd [#allocation4], %s26
      %s29 = sshll.u32 [#allocation5], 4
      %s30 = int_to_ptr.vmem [resolvable:$true] %s29
      %32 = dma.vmem_to_hbm [thread:$0]  %s30, 128, %s1, [#allocation4]
    $region13: #{tpu_custom_call.1} parent=1 // pred_fallthru
      _
    // Predicated region
    $region14: #{tpu_custom_call.1} parent=1 // pred_check
      _
    $region15: #{tpu_custom_call.1} parent=1 // pred_check_branch
      %34 = sbr.rel (0) target = $region17
    $region16: #{tpu_custom_call.1} parent=1 // pred_region
      %35 = dma.done [#allocation4], 128
    $region17: #{tpu_custom_call.1} parent=1 // pred_fallthru
      _
    %36 = vsyncpa [#allocation3], 1
    %37 = vsyncpa [#allocation4], 1

// kernel: _lambda_.9
$region0: #{_lambda_.9}
  #allocation0 [shape = 'u32[]', space=smem, size = 0x4, offset = 0x4, fixed_abs, tag = 'smem constant byte address 0x4 - core index']
  #allocation1 [shape = 'u32[144,128]{1,0:T(1,128)}', space=vmem, size = 0x12000, scoped, tag = 'internal scratch']
  %s0 = inlined_call_operand.vmem [shape: f32[16,32], index: 0, kind: input, shape index: {}]
  %s1 = inlined_call_operand.vmem [shape: f32[1,32], index: 1, kind: input, shape index: {}]
  %s2 = inlined_call_operand.vmem [shape: f32[1,32], index: 2, kind: input, shape index: {}]
  %s3 = inlined_call_operand.vmem [shape: f32[32,96], index: 3, kind: input, shape index: {}]
  %s4 = inlined_call_operand.vmem [shape: f32[1,96], index: 4, kind: input, shape index: {}]
  %s5 = inlined_call_operand.vmem [shape: f32[16,96], index: 5, kind: output, shape index: {}]
  %s6 = sld [smem:[#allocation0]]
  $region30: #{_lambda_.9} parent=0
    _
  %s8 = ssub.s32 1, %s6
  %s9 = scalar_select 0, %s8, %s6
  // Predicated region
  $region2: #{_lambda_.9} parent=0 // pred_check
    _
  $region3: #{_lambda_.9} parent=0 // pred_check_branch
    %11 = sbr.rel (0) target = $region5
  $region4: #{_lambda_.9} parent=0 // pred_region
    _
  $region5: #{_lambda_.9} parent=0 // pred_fallthru
    _
  // Predicated region
  $region6: #{_lambda_.9} parent=0 // pred_check
    _
  $region7: #{_lambda_.9} parent=0 // pred_check_branch
    %13 = sbr.rel (0) target = $region9
  $region8: #{_lambda_.9} parent=0 // pred_region
    _
  $region9: #{_lambda_.9} parent=0 // pred_fallthru
    _
  // Predicated region
  $region10: #{_lambda_.9} parent=0 // pred_check
    _
  $region11: #{_lambda_.9} parent=0 // pred_check_branch
    %15 = sbr.rel (0) target = $region13
  $region12: #{_lambda_.9} parent=0 // pred_region
    _
  $region13: #{_lambda_.9} parent=0 // pred_fallthru
    _
  // Predicated region
  $region14: #{_lambda_.9} parent=0 // pred_check
    _
  $region15: #{_lambda_.9} parent=0 // pred_check_branch
    %17 = sbr.rel (0) target = $region17
  $region16: #{_lambda_.9} parent=0 // pred_region
    _
  $region17: #{_lambda_.9} parent=0 // pred_fallthru
    _
  // Predicated region
  $region18: #{_lambda_.9} parent=0 // pred_check
    _
  $region19: #{_lambda_.9} parent=0 // pred_check_branch
    %19 = sbr.rel (0) target = $region21
  $region20: #{_lambda_.9} parent=0 // pred_region
    _
  $region21: #{_lambda_.9} parent=0 // pred_fallthru
    _
  %v20 = vld [vmem:[%s0] sm:$0xff]
  %v21 = vld [vmem:[%s0 + $0x8] sm:$0xff]
  %v22 = vld [vmem:[%s1] sm:$0x1]
  %v23 = vld [vmem:[%s2] sm:$0x1]
  %vm24 = vcmask 261120
  %v25 = vsel %vm24, %v20, 0.0
  %26 = vadd.xlane.f32.xlu0 %v25
  %v27 = vpop.xlane.xlu0 %26
  %v28 = vsel %vm24, %v21, 0.0
  %29 = vadd.xlane.f32.xlu0 %v28
  %v30 = vpop.xlane.xlu0 %29
  %v31 = vrcp.pop 32.0
  %v32 = vmul.f32 %v27, %v31
  %v33 = vmul.f32 %v30, %v31
  %v34 = vsub.f32 %v20, %v32
  %v35 = vsub.f32 %v21, %v33
  %v36 = vmul.f32 %v34, %v34
  %v37 = vmul.f32 %v35, %v35
  %v38 = vsel %vm24, %v36, 0.0
  %39 = vadd.xlane.f32.xlu0 %v38
  %v40 = vpop.xlane.xlu0 %39
  %v41 = vsel %vm24, %v37, 0.0
  %42 = vadd.xlane.f32.xlu0 %v41
  %v43 = vpop.xlane.xlu0 %42
  %v44 = vmul.f32 %v40, %v31
  %v45 = vmul.f32 %v43, %v31
  %v46 = vadd.f32 %v44, 1e-05
  %v47 = vadd.f32 %v45, 1e-05
  %v48 = vrsqrt.pop %v46
  %v49 = vrsqrt.pop %v47
  %v50 = vmul.f32 %v34, %v48
  %v51 = vmul.f32 %v35, %v49
  %v53 = vlaneseq
  %v54 = vshrl.u32 %v53, 7
  %v55 = vsub.s32 0, %v54
  %v56 = vrot.slane %v22, %v55
  %v58 = vmul.f32 %v50, %v56
  %v59 = vmul.f32 %v51, %v56
  %v61 = vlaneseq
  %v62 = vshrl.u32 %v61, 7
  %v63 = vsub.s32 0, %v62
  %v64 = vrot.slane %v23, %v63
  %v66 = vadd.f32 %v58, %v64
  %v67 = vadd.f32 %v59, %v64
  %v68 = vld [vmem:[%s3] sm:$0xff]
  %v69 = vld [vmem:[%s3 + $0x8] sm:$0xff]
  %v70 = vld [vmem:[%s3 + $0x10] sm:$0xff]
  %v71 = vld [vmem:[%s3 + $0x18] sm:$0xff]
  %v72 = vld [vmem:[%s4] sm:$0x1]
  %v74 = vlaneseq
  %v75 = vshrl.u32 %v74, 7
  %v76 = vsub.s32 0, %v75
  %v77 = vrot.slane %v72, %v76
  %v80 = vsel %vm24, %v66, 0
  %v83 = vsel %vm24, %v67, 0
  %85 = vmatprep.subr.mxu0 0.0
  %86 = vmatpush1.msra.mxu0 %v68
  %87 = vmatprep.subr.mxu0 0.0
  %88 = vmatpush1.msra.mxu0 %v69
  %89 = vmatprep.subr.mxu0 0.0
  %90 = vmatpush1.msra.mxu0 %v70
  %91 = vmatprep.subr.mxu0 0.0
  %92 = vmatpush1.msra.mxu0 %v71
  %93 = vmatprep.subr.mxu0 0.0
  %94 = vmatpush1.msra.mxu0 0.0
  %95 = vmatprep.subr.mxu0 0.0
  %96 = vmatpush1.msra.mxu0 0.0
  %97 = vmatprep.subr.mxu0 0.0
  %98 = vmatpush1.msra.mxu0 0.0
  %99 = vmatprep.subr.mxu0 0.0
  %100 = vmatpush1.msra.mxu0 0.0
  %101 = vmatprep.subr.mxu0 0.0
  %102 = vmatpush1.msra.mxu0 0.0
  %103 = vmatprep.subr.mxu0 0.0
  %104 = vmatpush1.msra.mxu0 0.0
  %105 = vmatprep.subr.mxu0 0.0
  %106 = vmatpush1.msra.mxu0 0.0
  %107 = vmatprep.subr.mxu0 0.0
  %108 = vmatpush1.msra.mxu0 0.0
  %109 = vmatprep.subr.mxu0 0.0
  %110 = vmatpush1.msra.mxu0 0.0
  %111 = vmatprep.subr.mxu0 0.0
  %112 = vmatpush1.msra.mxu0 0.0
  %113 = vmatprep.subr.mxu0 0.0
  %114 = vmatpush1.msra.mxu0 0.0
  %115 = vmatprep.subr.mxu0 0.0
  %116 = vmatpush1.msra.mxu0 0.0
  %117 = vmatprep.subr.mxu0 0.0
  %118 = vmatpush1.msra.mxu0 0.0
  %119 = vmatprep.subr.mxu0 0.0
  %120 = vmatpush1.msra.mxu0 0.0
  %121 = vmatprep.subr.mxu0 0.0
  %122 = vmatpush1.msra.mxu0 0.0
  %123 = vmatprep.subr.mxu0 0.0
  %124 = vmatpush1.msra.mxu0 0.0
  %125 = vmatprep.subr.mxu0 0.0
  %126 = vmatpush1.msra.mxu0 0.0
  %127 = vmatprep.subr.mxu0 0.0
  %128 = vmatpush1.msra.mxu0 0.0
  %129 = vmatprep.subr.mxu0 0.0
  %130 = vmatpush1.msra.mxu0 0.0
  %131 = vmatprep.subr.mxu0 0.0
  %132 = vmatpush1.msra.mxu0 0.0
  %133 = vmatprep.subr.mxu0 0.0
  %134 = vmatpush1.msra.mxu0 0.0
  %135 = vmatprep.subr.mxu0 0.0
  %136 = vmatpush1.msra.mxu0 0.0
  %137 = vmatprep.subr.mxu0 0.0
  %138 = vmatpush1.msra.mxu0 0.0
  %139 = vmatprep.subr.mxu0 0.0
  %140 = vmatpush1.msra.mxu0 0.0
  %141 = vmatprep.subr.mxu0 0.0
  %142 = vmatpush1.msra.mxu0 0.0
  %143 = vmatprep.subr.mxu0 0.0
  %144 = vmatpush1.msra.mxu0 0.0
  %145 = vmatprep.subr.mxu0 0.0
  %146 = vmatpush1.msra.mxu0 0.0
  %147 = vmatprep.subr.mxu0 0.0
  %148 = vmatpush1.msra.mxu0 0.0
  %149 = vmatprep.mubr.f32.mxu0 0.0
  %150 = vmatmul.mubr.f32.gmra.mrb[0].mxu0 %v80
  %v151 = vpop.f32.mrb[0].mxu0
  %v152 = vadd.f32 %v77, %v151
  %v153 = vpop.f32.mrb[0].mxu0
  %154 = vmatprep.mubr.f32.mxu0 0.0
  %155 = vmatmul.mubr.f32.gmra.mrb[0].mxu0 %v83
  %v156 = vpop.f32.mrb[0].mxu0
  %v157 = vadd.f32 %v77, %v156
  %v158 = vpop.f32.mrb[0].mxu0
  %159 = vdwg.mxu0
  %vm160 = vcmask 785408
  %161 = vst.msk [vmem:[%s5] sm:$0xff] %vm160, %v152
  %162 = vst.msk [vmem:[%s5 + $0x8] sm:$0xff] %vm160, %v157
  // Predicated region
  $region22: #{_lambda_.9} parent=0 // pred_check
    _
  $region23: #{_lambda_.9} parent=0 // pred_check_branch
    %164 = sbr.rel (0) target = $region25
  $region24: #{_lambda_.9} parent=0 // pred_region
    _
  $region25: #{_lambda_.9} parent=0 // pred_fallthru
    _
  // Predicated region
  $region26: #{_lambda_.9} parent=0 // pred_check
    _
  $region27: #{_lambda_.9} parent=0 // pred_check_branch
    %166 = sbr.rel (0) target = $region29
  $region28: #{_lambda_.9} parent=0 // pred_region
    _
  $region29: #{_lambda_.9} parent=0 // pred_fallthru
    _

// kernel: _lambda_.11
$region0: #{_lambda_.11}
  #allocation0 [shape = 'u32[]', space=smem, size = 0x4, offset = 0x4, fixed_abs, tag = 'smem constant byte address 0x4 - core index']
  #allocation1 [shape = 'u32[144,128]{1,0:T(1,128)}', space=vmem, size = 0x12000, scoped, tag = 'internal scratch']
  %s0 = inlined_call_operand.vmem [shape: f32[16,32], index: 0, kind: input, shape index: {}]
  %s1 = inlined_call_operand.vmem [shape: f32[16,32], index: 1, kind: input, shape index: {}]
  %s2 = inlined_call_operand.vmem [shape: f32[32,32], index: 2, kind: input, shape index: {}]
  %s3 = inlined_call_operand.vmem [shape: f32[1,32], index: 3, kind: input, shape index: {}]
  %s4 = inlined_call_operand.vmem [shape: f32[16,32], index: 4, kind: output, shape index: {}]
  %s5 = sld [smem:[#allocation0]]
  $region26: #{_lambda_.11} parent=0
    _
  %s7 = ssub.s32 1, %s5
  %s8 = scalar_select 0, %s7, %s5
  // Predicated region
  $region2: #{_lambda_.11} parent=0 // pred_check
    _
  $region3: #{_lambda_.11} parent=0 // pred_check_branch
    %10 = sbr.rel (0) target = $region5
  $region4: #{_lambda_.11} parent=0 // pred_region
    _
  $region5: #{_lambda_.11} parent=0 // pred_fallthru
    _
  // Predicated region
  $region6: #{_lambda_.11} parent=0 // pred_check
    _
  $region7: #{_lambda_.11} parent=0 // pred_check_branch
    %12 = sbr.rel (0) target = $region9
  $region8: #{_lambda_.11} parent=0 // pred_region
    _
  $region9: #{_lambda_.11} parent=0 // pred_fallthru
    _
  // Predicated region
  $region10: #{_lambda_.11} parent=0 // pred_check
    _
  $region11: #{_lambda_.11} parent=0 // pred_check_branch
    %14 = sbr.rel (0) target = $region13
  $region12: #{_lambda_.11} parent=0 // pred_region
    _
  $region13: #{_lambda_.11} parent=0 // pred_fallthru
    _
  // Predicated region
  $region14: #{_lambda_.11} parent=0 // pred_check
    _
  $region15: #{_lambda_.11} parent=0 // pred_check_branch
    %16 = sbr.rel (0) target = $region17
  $region16: #{_lambda_.11} parent=0 // pred_region
    _
  $region17: #{_lambda_.11} parent=0 // pred_fallthru
    _
  %v17 = vld [vmem:[%s1] sm:$0xff]
  %v18 = vld [vmem:[%s1 + $0x8] sm:$0xff]
  %v19 = vld [vmem:[%s2] sm:$0xff]
  %v20 = vld [vmem:[%s2 + $0x8] sm:$0xff]
  %v21 = vld [vmem:[%s2 + $0x10] sm:$0xff]
  %v22 = vld [vmem:[%s2 + $0x18] sm:$0xff]
  %vm23 = vcmask 261120
  %v25 = vsel %vm23, %v17, 0
  %v28 = vsel %vm23, %v18, 0
  %30 = vmatprep.subr.mxu0 0.0
  %31 = vmatpush1.msra.mxu0 %v19
  %32 = vmatprep.subr.mxu0 0.0
  %33 = vmatpush1.msra.mxu0 %v20
  %34 = vmatprep.subr.mxu0 0.0
  %35 = vmatpush1.msra.mxu0 %v21
  %36 = vmatprep.subr.mxu0 0.0
  %37 = vmatpush1.msra.mxu0 %v22
  %38 = vmatprep.subr.mxu0 0.0
  %39 = vmatpush1.msra.mxu0 0.0
  %40 = vmatprep.subr.mxu0 0.0
  %41 = vmatpush1.msra.mxu0 0.0
  %42 = vmatprep.subr.mxu0 0.0
  %43 = vmatpush1.msra.mxu0 0.0
  %44 = vmatprep.subr.mxu0 0.0
  %45 = vmatpush1.msra.mxu0 0.0
  %46 = vmatprep.subr.mxu0 0.0
  %47 = vmatpush1.msra.mxu0 0.0
  %48 = vmatprep.subr.mxu0 0.0
  %49 = vmatpush1.msra.mxu0 0.0
  %50 = vmatprep.subr.mxu0 0.0
  %51 = vmatpush1.msra.mxu0 0.0
  %52 = vmatprep.subr.mxu0 0.0
  %53 = vmatpush1.msra.mxu0 0.0
  %54 = vmatprep.subr.mxu0 0.0
  %55 = vmatpush1.msra.mxu0 0.0
  %56 = vmatprep.subr.mxu0 0.0
  %57 = vmatpush1.msra.mxu0 0.0
  %58 = vmatprep.subr.mxu0 0.0
  %59 = vmatpush1.msra.mxu0 0.0
  %60 = vmatprep.subr.mxu0 0.0
  %61 = vmatpush1.msra.mxu0 0.0
  %62 = vmatprep.subr.mxu0 0.0
  %63 = vmatpush1.msra.mxu0 0.0
  %64 = vmatprep.subr.mxu0 0.0
  %65 = vmatpush1.msra.mxu0 0.0
  %66 = vmatprep.subr.mxu0 0.0
  %67 = vmatpush1.msra.mxu0 0.0
  %68 = vmatprep.subr.mxu0 0.0
  %69 = vmatpush1.msra.mxu0 0.0
  %70 = vmatprep.subr.mxu0 0.0
  %71 = vmatpush1.msra.mxu0 0.0
  %72 = vmatprep.subr.mxu0 0.0
  %73 = vmatpush1.msra.mxu0 0.0
  %74 = vmatprep.subr.mxu0 0.0
  %75 = vmatpush1.msra.mxu0 0.0
  %76 = vmatprep.subr.mxu0 0.0
  %77 = vmatpush1.msra.mxu0 0.0
  %78 = vmatprep.subr.mxu0 0.0
  %79 = vmatpush1.msra.mxu0 0.0
  %80 = vmatprep.subr.mxu0 0.0
  %81 = vmatpush1.msra.mxu0 0.0
  %82 = vmatprep.subr.mxu0 0.0
  %83 = vmatpush1.msra.mxu0 0.0
  %84 = vmatprep.subr.mxu0 0.0
  %85 = vmatpush1.msra.mxu0 0.0
  %86 = vmatprep.subr.mxu0 0.0
  %87 = vmatpush1.msra.mxu0 0.0
  %88 = vmatprep.subr.mxu0 0.0
  %89 = vmatpush1.msra.mxu0 0.0
  %90 = vmatprep.subr.mxu0 0.0
  %91 = vmatpush1.msra.mxu0 0.0
  %92 = vmatprep.subr.mxu0 0.0
  %93 = vmatpush1.msra.mxu0 0.0
  %94 = vmatprep.mubr.f32.mxu0 0.0
  %95 = vmatmul.mubr.f32.gmra.mrb[0].mxu0 %v25
  %v96 = vpop.f32.mrb[0].mxu0
  %v97 = vadd.f32 0.0, %v96
  %v98 = vpop.f32.mrb[0].mxu0
  %99 = vmatprep.mubr.f32.mxu0 0.0
  %100 = vmatmul.mubr.f32.gmra.mrb[0].mxu0 %v28
  %v101 = vpop.f32.mrb[0].mxu0
  %v102 = vadd.f32 0.0, %v101
  %v103 = vpop.f32.mrb[0].mxu0
  %104 = vdwg.mxu0
  %v105 = vld [vmem:[%s0] sm:$0xff]
  %v106 = vld [vmem:[%s0 + $0x8] sm:$0xff]
  %v107 = vadd.f32 %v105, %v97
  %v108 = vadd.f32 %v106, %v102
  %v109 = vld [vmem:[%s3] sm:$0x1]
  %v111 = vlaneseq
  %v112 = vshrl.u32 %v111, 7
  %v113 = vsub.s32 0, %v112
  %v114 = vrot.slane %v109, %v113
  %v116 = vadd.f32 %v107, %v114
  %v117 = vadd.f32 %v108, %v114
  %118 = vst.msk [vmem:[%s4] sm:$0xff] %vm23, %v116
  %119 = vst.msk [vmem:[%s4 + $0x8] sm:$0xff] %vm23, %v117
  // Predicated region
  $region18: #{_lambda_.11} parent=0 // pred_check
    _
  $region19: #{_lambda_.11} parent=0 // pred_check_branch
    %121 = sbr.rel (0) target = $region21
  $region20: #{_lambda_.11} parent=0 // pred_region
    _
  $region21: #{_lambda_.11} parent=0 // pred_fallthru
    _
  // Predicated region
  $region22: #{_lambda_.11} parent=0 // pred_check
    _
  $region23: #{_lambda_.11} parent=0 // pred_check_branch
    %123 = sbr.rel (0) target = $region25
  $region24: #{_lambda_.11} parent=0 // pred_region
    _
  $region25: #{_lambda_.11} parent=0 // pred_fallthru
    _

// kernel: _lambda_.10
$region0: #{_lambda_.10}
  #allocation0 [shape = 'u32[]', space=smem, size = 0x4, offset = 0x4, fixed_abs, tag = 'smem constant byte address 0x4 - core index']
  #allocation1 [shape = 'u32[144,128]{1,0:T(1,128)}', space=vmem, size = 0x12000, scoped, tag = 'internal scratch']
  #allocation2 [shape = 'f32[8,32]{1,0:T(8,128)}', space=vmem, size = 0x1000, scoped, tag = 'scratch operand']
  %s0 = inlined_call_operand.vmem [shape: f32[2,8,96], index: 0, kind: input, shape index: {}]
  %s1 = inlined_call_operand.vmem [shape: f32[2,8,32], index: 1, kind: output, shape index: {}]
  %s2 = sld [smem:[#allocation0]]
  $region37: #{_lambda_.10} parent=0
    _
  %s4 = ssub.s32 1, %s2
  %s5 = scalar_select 0, %s4, %s2
  loop: start=0, step=1, limit=4
  $region2: #{_lambda_.10} parent=0 // loop_pre_header
    _
  $region3: #{_lambda_.10} parent=0 // loop_header
    %s7 = sphi 0, %s11
    %p8 = scmp.ge.s32.totalorder %s7, 4
    %s17 = sphi 0, %s19
    %s20 = sphi 0, %s17
    %s21 = sphi 0, %s20
    %s37 = sphi 0, %s21
    %s43 = sphi 0, %s45
    %s46 = sphi 0, %s43
    %s47 = sphi 0, %s46
    %s63 = sphi 0, %s47
  $region4: #{_lambda_.10} parent=0 // loop_header_branch
    %10 = sbr.rel (%p8) target = $region8
  $region5: #{_lambda_.10} parent=0 // loop_body
    %s12 = ssub.s32 %s7, 1
    %s13 = ssub.s32 %s7, 2
    %s14 = sadd.s32 %s7, 1
    %s15 = ssub.s32 %s7, %s14
    %p16 = scmp.eq.s32.totalorder %s15, 0
    %s18 = sadd.s32 %s17, 1
    %s19 = scalar_select %p16, %s17, %s18
    %p22 = pneg %p16
    %p23 = scmp.eq.s32.totalorder %s7, 1
    %p24 = por %p22, %p23
    %p25 = scmp.ne.s32.totalorder %s17, %s20
    %p26 = scmp.eq.s32.totalorder %s7, 0
    %p27 = por %p25, %p26
    %p28 = scmp.ne.s32.totalorder %s17, %s20
    %p29 = scmp.eq.s32.totalorder %s12, 1
    %p30 = por %p28, %p29
    %p31 = scmp.ne.s32.totalorder %s20, %s21
    %p32 = scmp.eq.s32.totalorder %s12, 0
    %p33 = por %p31, %p32
    %p34 = scmp.ne.s32.totalorder %s20, %s21
    %p35 = scmp.eq.s32.totalorder %s13, 1
    %p36 = por %p34, %p35
    %p38 = scmp.ne.s32.totalorder %s21, %s37
    %p39 = scmp.eq.s32.totalorder %s13, 0
    %p40 = por %p38, %p39
    %s41 = ssub.s32 %s7, %s14
    %p42 = scmp.eq.s32.totalorder %s41, 0
    %s44 = sadd.s32 %s43, 1
    %s45 = scalar_select %p42, %s43, %s44
    %p48 = pneg %p42
    %p49 = scmp.eq.s32.totalorder %s7, 1
    %p50 = por %p48, %p49
    %p51 = scmp.ne.s32.totalorder %s43, %s46
    %p52 = scmp.eq.s32.totalorder %s7, 0
    %p53 = por %p51, %p52
    %p54 = scmp.ne.s32.totalorder %s43, %s46
    %p55 = scmp.eq.s32.totalorder %s12, 1
    %p56 = por %p54, %p55
    %p57 = scmp.ne.s32.totalorder %s46, %s47
    %p58 = scmp.eq.s32.totalorder %s12, 0
    %p59 = por %p57, %p58
    %p60 = scmp.ne.s32.totalorder %s46, %s47
    %p61 = scmp.eq.s32.totalorder %s13, 1
    %p62 = por %p60, %p61
    %p64 = scmp.ne.s32.totalorder %s47, %s63
    %p65 = scmp.eq.s32.totalorder %s13, 0
    %p66 = por %p64, %p65
    %p67 = scmp.le.s32.totalorder 1, %s7
    %p68 = scmp.lt.s32.totalorder %s7, 3
    %p69 = pnand %p67, %p68
    %p70 = pneg %p69
    // Predicated region
    $region9: #{_lambda_.10} parent=5 // pred_check
      _
    $region10: #{_lambda_.10} parent=5 // pred_check_branch
      %72 = sbr.rel (%p69) target = $region12
    $region11: #{_lambda_.10} parent=5 // pred_region
      %s73 = ssub.s32 %s7, 1
    $region12: #{_lambda_.10} parent=5 // pred_fallthru
      _
    %p74 = scmp.lt.s32.totalorder %s7, 2
    // Predicated region
    $region13: #{_lambda_.10} parent=5 // pred_check
      %p75 = pneg %p74
    $region14: #{_lambda_.10} parent=5 // pred_check_branch
      %77 = sbr.rel (%p75) target = $region16
    $region15: #{_lambda_.10} parent=5 // pred_region
      // Predicated region
      $region17: #{_lambda_.10} parent=15 // pred_check
        %p78 = pneg %p27
      $region18: #{_lambda_.10} parent=15 // pred_check_branch
        %80 = sbr.rel (%p78) target = $region20
      $region19: #{_lambda_.10} parent=15 // pred_region
        %p81 = scmp.lt.s32.totalorder %s7, 1
        %s82 = scalar_select %p81, %s7, 1
        %s83 = smul.addr %s82, 8
        %s84 = scalar_lea.vmem %s0, %s83
      $region20: #{_lambda_.10} parent=15 // pred_fallthru
        _
    $region16: #{_lambda_.10} parent=5 // pred_fallthru
      _
    %p85 = scmp.le.s32.totalorder 1, %s7
    %p86 = scmp.lt.s32.totalorder %s7, 3
    %p87 = pnand %p85, %p86
    %p88 = pneg %p87
    // Predicated region
    $region21: #{_lambda_.10} parent=5 // pred_check
      _
    $region22: #{_lambda_.10} parent=5 // pred_check_branch
      %90 = sbr.rel (%p87) target = $region24
    $region23: #{_lambda_.10} parent=5 // pred_region
      %s91 = ssub.s32 %s7, 1
      %p92 = scmp.lt.s32.totalorder %s12, 1
      %s93 = scalar_select %p92, %s12, 1
      %s94 = smul.addr %s93, 8
      %s95 = scalar_lea.vmem %s0, %s94
      %p96 = pneg %p33
      %p97 = pneg %p30
      %p98 = pneg %p59
      %p99 = pneg %p56
      %p100 = scmp.lt.s32.totalorder %s12, 1
      %s101 = scalar_select %p100, %s12, 1
      %s102 = smul.addr %s101, 8
      %s103 = scalar_lea.vmem %s1, %s102
      %p104 = scmp.lt.s32.totalorder %s12, 1
      %s105 = scalar_select %p104, %s12, 1
      %s106 = smul.addr %s105, 8
      %s107 = scalar_lea.vmem %s0, %s106
      %p108 = scmp.lt.s32.totalorder %s12, 1
      %s109 = scalar_select %p108, %s12, 1
      %s110 = smul.addr %s109, 8
      %s111 = scalar_lea.vmem %s1, %s110
      %v112 = vld [vmem:[%s107] sm:$0xff]
      %v113 = vlaneseq
      %v114 = vshrl.u32 %v113, 7
      %v115 = vlaneseq
      %v116 = vand.u32 %v115, 127
      %vm117 = vcmp.gt.s32.totalorder %v116, %v114
      %v118 = vmul.f32 %v112, 0.35355338
      %120 = vrot.lane.b32.xlu0 %v112, 96
      %v121 = vpop.permute.xlu0 %120
      %vm122 = vcmask 64512
      %v124 = vsel %vm122, %v118, 0
      %v126 = vsel %vm122, %v121, 0
      %128 = vmatprep.subr.mxu0 0.0
      %129 = vmatpush1.xpose.msra.mxu0 %v126
      %130 = vmatprep.subr.mxu0 0.0
      %131 = vmatpush1.xpose.msra.mxu0 0.0
      %132 = vmatprep.subr.mxu0 0.0
      %133 = vmatpush1.xpose.msra.mxu0 0.0
      %134 = vmatprep.subr.mxu0 0.0
      %135 = vmatpush1.xpose.msra.mxu0 0.0
      %136 = vmatprep.subr.mxu0 0.0
      %137 = vmatpush1.xpose.msra.mxu0 0.0
      %138 = vmatprep.subr.mxu0 0.0
      %139 = vmatpush1.xpose.msra.mxu0 0.0
      %140 = vmatprep.subr.mxu0 0.0
      %141 = vmatpush1.xpose.msra.mxu0 0.0
      %142 = vmatprep.subr.mxu0 0.0
      %143 = vmatpush1.xpose.msra.mxu0 0.0
      %144 = vmatprep.subr.mxu0 0.0
      %145 = vmatpush1.xpose.msra.mxu0 0.0
      %146 = vmatprep.subr.mxu0 0.0
      %147 = vmatpush1.xpose.msra.mxu0 0.0
      %148 = vmatprep.subr.mxu0 0.0
      %149 = vmatpush1.xpose.msra.mxu0 0.0
      %150 = vmatprep.subr.mxu0 0.0
      %151 = vmatpush1.xpose.msra.mxu0 0.0
      %152 = vmatprep.subr.mxu0 0.0
      %153 = vmatpush1.xpose.msra.mxu0 0.0
      %154 = vmatprep.subr.mxu0 0.0
      %155 = vmatpush1.xpose.msra.mxu0 0.0
      %156 = vmatprep.subr.mxu0 0.0
      %157 = vmatpush1.xpose.msra.mxu0 0.0
      %158 = vmatprep.subr.mxu0 0.0
      %159 = vmatpush1.xpose.msra.mxu0 0.0
      %160 = vmatprep.subr.mxu0 0.0
      %161 = vmatpush1.xpose.msra.mxu0 0.0
      %162 = vmatprep.subr.mxu0 0.0
      %163 = vmatpush1.xpose.msra.mxu0 0.0
      %164 = vmatprep.subr.mxu0 0.0
      %165 = vmatpush1.xpose.msra.mxu0 0.0
      %166 = vmatprep.subr.mxu0 0.0
      %167 = vmatpush1.xpose.msra.mxu0 0.0
      %168 = vmatprep.subr.mxu0 0.0
      %169 = vmatpush1.xpose.msra.mxu0 0.0
      %170 = vmatprep.subr.mxu0 0.0
      %171 = vmatpush1.xpose.msra.mxu0 0.0
      %172 = vmatprep.subr.mxu0 0.0
      %173 = vmatpush1.xpose.msra.mxu0 0.0
      %174 = vmatprep.subr.mxu0 0.0
      %175 = vmatpush1.xpose.msra.mxu0 0.0
      %176 = vmatprep.subr.mxu0 0.0
      %177 = vmatpush1.xpose.msra.mxu0 0.0
      %178 = vmatprep.subr.mxu0 0.0
      %179 = vmatpush1.xpose.msra.mxu0 0.0
      %180 = vmatprep.subr.mxu0 0.0
      %181 = vmatpush1.xpose.msra.mxu0 0.0
      %182 = vmatprep.subr.mxu0 0.0
      %183 = vmatpush1.xpose.msra.mxu0 0.0
      %184 = vmatprep.subr.mxu0 0.0
      %185 = vmatpush1.xpose.msra.mxu0 0.0
      %186 = vmatprep.subr.mxu0 0.0
      %187 = vmatpush1.xpose.msra.mxu0 0.0
      %188 = vmatprep.subr.mxu0 0.0
      %189 = vmatpush1.xpose.msra.mxu0 0.0
      %190 = vmatprep.subr.mxu0 0.0
      %191 = vmatpush1.xpose.msra.mxu0 0.0
      %192 = vmatprep.mubr.f32.mxu0 0.0
      %193 = vmatmul.mubr.f32.gmra.mrb[0].mxu0 %v124
      %v194 = vpop.f32.mrb[0].mxu0
      %v195 = vadd.f32 0.0, %v194
      %v196 = vpop.f32.mrb[0].mxu0
      %197 = vdwg.mxu0
      %v198 = vsel %vm117, -inf, %v195
      %v199 = vsel %vm122, %v198, -inf
      %200 = vmax.xlane.f32.xlu0 %v199
      %v201 = vpop.xlane.xlu0 %200
      %v202 = vsub.f32 %v198, %v201
      %v203 = vmul.f32 %v202, 1.442695
      %v204 = vpow.pop %v203
      %v205 = vsel %vm122, %v204, 0.0
      %206 = vadd.xlane.f32.xlu0 %v205
      %v207 = vpop.xlane.xlu0 %206
      %v208 = vrcp.pop %v207
      %v209 = vmul.f32 1.0, %v208
      %v210 = vmul.f32 %v204, %v209
      %211 = vrot.lane.b32.xlu0 %v112, 64
      %v212 = vpop.permute.xlu0 %211
      %v215 = vsel %vm122, %v210, 0
      %217 = vmatprep.subr.mxu0 0.0
      %218 = vmatpush1.msra.mxu0 %v212
      %219 = vmatprep.subr.mxu0 0.0
      %220 = vmatpush1.msra.mxu0 0.0
      %221 = vmatprep.subr.mxu0 0.0
      %222 = vmatpush1.msra.mxu0 0.0
      %223 = vmatprep.subr.mxu0 0.0
      %224 = vmatpush1.msra.mxu0 0.0
      %225 = vmatprep.subr.mxu0 0.0
      %226 = vmatpush1.msra.mxu0 0.0
      %227 = vmatprep.subr.mxu0 0.0
      %228 = vmatpush1.msra.mxu0 0.0
      %229 = vmatprep.subr.mxu0 0.0
      %230 = vmatpush1.msra.mxu0 0.0
      %231 = vmatprep.subr.mxu0 0.0
      %232 = vmatpush1.msra.mxu0 0.0
      %233 = vmatprep.subr.mxu0 0.0
      %234 = vmatpush1.msra.mxu0 0.0
      %235 = vmatprep.subr.mxu0 0.0
      %236 = vmatpush1.msra.mxu0 0.0
      %237 = vmatprep.subr.mxu0 0.0
      %238 = vmatpush1.msra.mxu0 0.0
      %239 = vmatprep.subr.mxu0 0.0
      %240 = vmatpush1.msra.mxu0 0.0
      %241 = vmatprep.subr.mxu0 0.0
      %242 = vmatpush1.msra.mxu0 0.0
      %243 = vmatprep.subr.mxu0 0.0
      %244 = vmatpush1.msra.mxu0 0.0
      %245 = vmatprep.subr.mxu0 0.0
      %246 = vmatpush1.msra.mxu0 0.0
      %247 = vmatprep.subr.mxu0 0.0
      %248 = vmatpush1.msra.mxu0 0.0
      %249 = vmatprep.subr.mxu0 0.0
      %250 = vmatpush1.msra.mxu0 0.0
      %251 = vmatprep.subr.mxu0 0.0
      %252 = vmatpush1.msra.mxu0 0.0
      %253 = vmatprep.subr.mxu0 0.0
      %254 = vmatpush1.msra.mxu0 0.0
      %255 = vmatprep.subr.mxu0 0.0
      %256 = vmatpush1.msra.mxu0 0.0
      %257 = vmatprep.subr.mxu0 0.0
      %258 = vmatpush1.msra.mxu0 0.0
      %259 = vmatprep.subr.mxu0 0.0
      %260 = vmatpush1.msra.mxu0 0.0
      %261 = vmatprep.subr.mxu0 0.0
      %262 = vmatpush1.msra.mxu0 0.0
      %263 = vmatprep.subr.mxu0 0.0
      %264 = vmatpush1.msra.mxu0 0.0
      %265 = vmatprep.subr.mxu0 0.0
      %266 = vmatpush1.msra.mxu0 0.0
      %267 = vmatprep.subr.mxu0 0.0
      %268 = vmatpush1.msra.mxu0 0.0
      %269 = vmatprep.subr.mxu0 0.0
      %270 = vmatpush1.msra.mxu0 0.0
      %271 = vmatprep.subr.mxu0 0.0
      %272 = vmatpush1.msra.mxu0 0.0
      %273 = vmatprep.subr.mxu0 0.0
      %274 = vmatpush1.msra.mxu0 0.0
      %275 = vmatprep.subr.mxu0 0.0
      %276 = vmatpush1.msra.mxu0 0.0
      %277 = vmatprep.subr.mxu0 0.0
      %278 = vmatpush1.msra.mxu0 0.0
      %279 = vmatprep.subr.mxu0 0.0
      %280 = vmatpush1.msra.mxu0 0.0
      %281 = vmatprep.mubr.f32.mxu0 0.0
      %282 = vmatmul.mubr.f32.gmra.mrb[0].mxu0 %v215
      %v283 = vpop.f32.mrb[0].mxu0
      %v284 = vadd.f32 0.0, %v283
      %v285 = vpop.f32.mrb[0].mxu0
      %286 = vdwg.mxu0
      %287 = vst.msk [vmem:[#allocation2] sm:$0xff] %vm122, %v284
      %288 = vrot.lane.b32.xlu0 %v118, 120
      %v289 = vpop.permute.xlu0 %288
      %290 = vrot.lane.b32.xlu0 %v112, 88
      %v291 = vpop.permute.xlu0 %290
      %v292 = vsel %vm122, %v289, 0
      %v294 = vsel %vm122, %v291, 0
      %296 = vmatprep.subr.mxu0 0.0
      %297 = vmatpush1.xpose.msra.mxu0 %v294
      %298 = vmatprep.subr.mxu0 0.0
      %299 = vmatpush1.xpose.msra.mxu0 0.0
      %300 = vmatprep.subr.mxu0 0.0
      %301 = vmatpush1.xpose.msra.mxu0 0.0
      %302 = vmatprep.subr.mxu0 0.0
      %303 = vmatpush1.xpose.msra.mxu0 0.0
      %304 = vmatprep.subr.mxu0 0.0
      %305 = vmatpush1.xpose.msra.mxu0 0.0
      %306 = vmatprep.subr.mxu0 0.0
      %307 = vmatpush1.xpose.msra.mxu0 0.0
      %308 = vmatprep.subr.mxu0 0.0
      %309 = vmatpush1.xpose.msra.mxu0 0.0
      %310 = vmatprep.subr.mxu0 0.0
      %311 = vmatpush1.xpose.msra.mxu0 0.0
      %312 = vmatprep.subr.mxu0 0.0
      %313 = vmatpush1.xpose.msra.mxu0 0.0
      %314 = vmatprep.subr.mxu0 0.0
      %315 = vmatpush1.xpose.msra.mxu0 0.0
      %316 = vmatprep.subr.mxu0 0.0
      %317 = vmatpush1.xpose.msra.mxu0 0.0
      %318 = vmatprep.subr.mxu0 0.0
      %319 = vmatpush1.xpose.msra.mxu0 0.0
      %320 = vmatprep.subr.mxu0 0.0
      %321 = vmatpush1.xpose.msra.mxu0 0.0
      %322 = vmatprep.subr.mxu0 0.0
      %323 = vmatpush1.xpose.msra.mxu0 0.0
      %324 = vmatprep.subr.mxu0 0.0
      %325 = vmatpush1.xpose.msra.mxu0 0.0
      %326 = vmatprep.subr.mxu0 0.0
      %327 = vmatpush1.xpose.msra.mxu0 0.0
      %328 = vmatprep.subr.mxu0 0.0
      %329 = vmatpush1.xpose.msra.mxu0 0.0
      %330 = vmatprep.subr.mxu0 0.0
      %331 = vmatpush1.xpose.msra.mxu0 0.0
      %332 = vmatprep.subr.mxu0 0.0
      %333 = vmatpush1.xpose.msra.mxu0 0.0
      %334 = vmatprep.subr.mxu0 0.0
      %335 = vmatpush1.xpose.msra.mxu0 0.0
      %336 = vmatprep.subr.mxu0 0.0
      %337 = vmatpush1.xpose.msra.mxu0 0.0
      %338 = vmatprep.subr.mxu0 0.0
      %339 = vmatpush1.xpose.msra.mxu0 0.0
      %340 = vmatprep.subr.mxu0 0.0
      %341 = vmatpush1.xpose.msra.mxu0 0.0
      %342 = vmatprep.subr.mxu0 0.0
      %343 = vmatpush1.xpose.msra.mxu0 0.0
      %344 = vmatprep.subr.mxu0 0.0
      %345 = vmatpush1.xpose.msra.mxu0 0.0
      %346 = vmatprep.subr.mxu0 0.0
      %347 = vmatpush1.xpose.msra.mxu0 0.0
      %348 = vmatprep.subr.mxu0 0.0
      %349 = vmatpush1.xpose.msra.mxu0 0.0
      %350 = vmatprep.subr.mxu0 0.0
      %351 = vmatpush1.xpose.msra.mxu0 0.0
      %352 = vmatprep.subr.mxu0 0.0
      %353 = vmatpush1.xpose.msra.mxu0 0.0
      %354 = vmatprep.subr.mxu0 0.0
      %355 = vmatpush1.xpose.msra.mxu0 0.0
      %356 = vmatprep.subr.mxu0 0.0
      %357 = vmatpush1.xpose.msra.mxu0 0.0
      %358 = vmatprep.subr.mxu0 0.0
      %359 = vmatpush1.xpose.msra.mxu0 0.0
      %360 = vmatprep.mubr.f32.mxu0 0.0
      %361 = vmatmul.mubr.f32.gmra.mrb[0].mxu0 %v292
      %v362 = vpop.f32.mrb[0].mxu0
      %v363 = vadd.f32 0.0, %v362
      %v364 = vpop.f32.mrb[0].mxu0
      %365 = vdwg.mxu0
      %v366 = vsel %vm117, -inf, %v363
      %v367 = vsel %vm122, %v366, -inf
      %368 = vmax.xlane.f32.xlu0 %v367
      %v369 = vpop.xlane.xlu0 %368
      %v370 = vsub.f32 %v366, %v369
      %v371 = vmul.f32 %v370, 1.442695
      %v372 = vpow.pop %v371
      %v373 = vsel %vm122, %v372, 0.0
      %374 = vadd.xlane.f32.xlu0 %v373
      %v375 = vpop.xlane.xlu0 %374
      %v376 = vrcp.pop %v375
      %v377 = vmul.f32 1.0, %v376
      %v378 = vmul.f32 %v372, %v377
      %379 = vrot.lane.b32.xlu0 %v112, 56
      %v380 = vpop.permute.xlu0 %379
      %v383 = vsel %vm122, %v378, 0
      %385 = vmatprep.subr.mxu0 0.0
      %386 = vmatpush1.msra.mxu0 %v380
      %387 = vmatprep.subr.mxu0 0.0
      %388 = vmatpush1.msra.mxu0 0.0
      %389 = vmatprep.subr.mxu0 0.0
      %390 = vmatpush1.msra.mxu0 0.0
      %391 = vmatprep.subr.mxu0 0.0
      %392 = vmatpush1.msra.mxu0 0.0
      %393 = vmatprep.subr.mxu0 0.0
      %394 = vmatpush1.msra.mxu0 0.0
      %395 = vmatprep.subr.mxu0 0.0
      %396 = vmatpush1.msra.mxu0 0.0
      %397 = vmatprep.subr.mxu0 0.0
      %398 = vmatpush1.msra.mxu0 0.0
      %399 = vmatprep.subr.mxu0 0.0
      %400 = vmatpush1.msra.mxu0 0.0
      %401 = vmatprep.subr.mxu0 0.0
      %402 = vmatpush1.msra.mxu0 0.0
      %403 = vmatprep.subr.mxu0 0.0
      %404 = vmatpush1.msra.mxu0 0.0
      %405 = vmatprep.subr.mxu0 0.0
      %406 = vmatpush1.msra.mxu0 0.0
      %407 = vmatprep.subr.mxu0 0.0
      %408 = vmatpush1.msra.mxu0 0.0
      %409 = vmatprep.subr.mxu0 0.0
      %410 = vmatpush1.msra.mxu0 0.0
      %411 = vmatprep.subr.mxu0 0.0
      %412 = vmatpush1.msra.mxu0 0.0
      %413 = vmatprep.subr.mxu0 0.0
      %414 = vmatpush1.msra.mxu0 0.0
      %415 = vmatprep.subr.mxu0 0.0
      %416 = vmatpush1.msra.mxu0 0.0
      %417 = vmatprep.subr.mxu0 0.0
      %418 = vmatpush1.msra.mxu0 0.0
      %419 = vmatprep.subr.mxu0 0.0
      %420 = vmatpush1.msra.mxu0 0.0
      %421 = vmatprep.subr.mxu0 0.0
      %422 = vmatpush1.msra.mxu0 0.0
      %423 = vmatprep.subr.mxu0 0.0
      %424 = vmatpush1.msra.mxu0 0.0
      %425 = vmatprep.subr.mxu0 0.0
      %426 = vmatpush1.msra.mxu0 0.0
      %427 = vmatprep.subr.mxu0 0.0
      %428 = vmatpush1.msra.mxu0 0.0
      %429 = vmatprep.subr.mxu0 0.0
      %430 = vmatpush1.msra.mxu0 0.0
      %431 = vmatprep.subr.mxu0 0.0
      %432 = vmatpush1.msra.mxu0 0.0
      %433 = vmatprep.subr.mxu0 0.0
      %434 = vmatpush1.msra.mxu0 0.0
      %435 = vmatprep.subr.mxu0 0.0
      %436 = vmatpush1.msra.mxu0 0.0
      %437 = vmatprep.subr.mxu0 0.0
      %438 = vmatpush1.msra.mxu0 0.0
      %439 = vmatprep.subr.mxu0 0.0
      %440 = vmatpush1.msra.mxu0 0.0
      %441 = vmatprep.subr.mxu0 0.0
      %442 = vmatpush1.msra.mxu0 0.0
      %443 = vmatprep.subr.mxu0 0.0
      %444 = vmatpush1.msra.mxu0 0.0
      %445 = vmatprep.subr.mxu0 0.0
      %446 = vmatpush1.msra.mxu0 0.0
      %447 = vmatprep.subr.mxu0 0.0
      %448 = vmatpush1.msra.mxu0 0.0
      %449 = vmatprep.mubr.f32.mxu0 0.0
      %450 = vmatmul.mubr.f32.gmra.mrb[0].mxu0 %v383
      %v451 = vpop.f32.mrb[0].mxu0
      %v452 = vadd.f32 0.0, %v451
      %v453 = vpop.f32.mrb[0].mxu0
      %454 = vdwg.mxu0
      %456 = vrot.lane.b32.xlu0 %v452, 8
      %v457 = vpop.permute.xlu0 %456
      %vm459 = vcmask 130112
      %460 = vst.msk [vmem:[#allocation2] sm:$0xff] %vm459, %v457
      %461 = vrot.lane.b32.xlu0 %v118, 112
      %v462 = vpop.permute.xlu0 %461
      %463 = vrot.lane.b32.xlu0 %v112, 80
      %v464 = vpop.permute.xlu0 %463
      %v465 = vsel %vm122, %v462, 0
      %v467 = vsel %vm122, %v464, 0
      %469 = vmatprep.subr.mxu0 0.0
      %470 = vmatpush1.xpose.msra.mxu0 %v467
      %471 = vmatprep.subr.mxu0 0.0
      %472 = vmatpush1.xpose.msra.mxu0 0.0
      %473 = vmatprep.subr.mxu0 0.0
      %474 = vmatpush1.xpose.msra.mxu0 0.0
      %475 = vmatprep.subr.mxu0 0.0
      %476 = vmatpush1.xpose.msra.mxu0 0.0
      %477 = vmatprep.subr.mxu0 0.0
      %478 = vmatpush1.xpose.msra.mxu0 0.0
      %479 = vmatprep.subr.mxu0 0.0
      %480 = vmatpush1.xpose.msra.mxu0 0.0
      %481 = vmatprep.subr.mxu0 0.0
      %482 = vmatpush1.xpose.msra.mxu0 0.0
      %483 = vmatprep.subr.mxu0 0.0
      %484 = vmatpush1.xpose.msra.mxu0 0.0
      %485 = vmatprep.subr.mxu0 0.0
      %486 = vmatpush1.xpose.msra.mxu0 0.0
      %487 = vmatprep.subr.mxu0 0.0
      %488 = vmatpush1.xpose.msra.mxu0 0.0
      %489 = vmatprep.subr.mxu0 0.0
      %490 = vmatpush1.xpose.msra.mxu0 0.0
      %491 = vmatprep.subr.mxu0 0.0
      %492 = vmatpush1.xpose.msra.mxu0 0.0
      %493 = vmatprep.subr.mxu0 0.0
      %494 = vmatpush1.xpose.msra.mxu0 0.0
      %495 = vmatprep.subr.mxu0 0.0
      %496 = vmatpush1.xpose.msra.mxu0 0.0
      %497 = vmatprep.subr.mxu0 0.0
      %498 = vmatpush1.xpose.msra.mxu0 0.0
      %499 = vmatprep.subr.mxu0 0.0
      %500 = vmatpush1.xpose.msra.mxu0 0.0
      %501 = vmatprep.subr.mxu0 0.0
      %502 = vmatpush1.xpose.msra.mxu0 0.0
      %503 = vmatprep.subr.mxu0 0.0
      %504 = vmatpush1.xpose.msra.mxu0 0.0
      %505 = vmatprep.subr.mxu0 0.0
      %506 = vmatpush1.xpose.msra.mxu0 0.0
      %507 = vmatprep.subr.mxu0 0.0
      %508 = vmatpush1.xpose.msra.mxu0 0.0
      %509 = vmatprep.subr.mxu0 0.0
      %510 = vmatpush1.xpose.msra.mxu0 0.0
      %511 = vmatprep.subr.mxu0 0.0
      %512 = vmatpush1.xpose.msra.mxu0 0.0
      %513 = vmatprep.subr.mxu0 0.0
      %514 = vmatpush1.xpose.msra.mxu0 0.0
      %515 = vmatprep.subr.mxu0 0.0
      %516 = vmatpush1.xpose.msra.mxu0 0.0
      %517 = vmatprep.subr.mxu0 0.0
      %518 = vmatpush1.xpose.msra.mxu0 0.0
      %519 = vmatprep.subr.mxu0 0.0
      %520 = vmatpush1.xpose.msra.mxu0 0.0
      %521 = vmatprep.subr.mxu0 0.0
      %522 = vmatpush1.xpose.msra.mxu0 0.0
      %523 = vmatprep.subr.mxu0 0.0
      %524 = vmatpush1.xpose.msra.mxu0 0.0
      %525 = vmatprep.subr.mxu0 0.0
      %526 = vmatpush1.xpose.msra.mxu0 0.0
      %527 = vmatprep.subr.mxu0 0.0
      %528 = vmatpush1.xpose.msra.mxu0 0.0
      %529 = vmatprep.subr.mxu0 0.0
      %530 = vmatpush1.xpose.msra.mxu0 0.0
      %531 = vmatprep.subr.mxu0 0.0
      %532 = vmatpush1.xpose.msra.mxu0 0.0
      %533 = vmatprep.mubr.f32.mxu0 0.0
      %534 = vmatmul.mubr.f32.gmra.mrb[0].mxu0 %v465
      %v535 = vpop.f32.mrb[0].mxu0
      %v536 = vadd.f32 0.0, %v535
      %v537 = vpop.f32.mrb[0].mxu0
      %538 = vdwg.mxu0
      %v539 = vsel %vm117, -inf, %v536
      %v540 = vsel %vm122, %v539, -inf
      %541 = vmax.xlane.f32.xlu0 %v540
      %v542 = vpop.xlane.xlu0 %541
      %v543 = vsub.f32 %v539, %v542
      %v544 = vmul.f32 %v543, 1.442695
      %v545 = vpow.pop %v544
      %v546 = vsel %vm122, %v545, 0.0
      %547 = vadd.xlane.f32.xlu0 %v546
      %v548 = vpop.xlane.xlu0 %547
      %v549 = vrcp.pop %v548
      %v550 = vmul.f32 1.0, %v549
      %v551 = vmul.f32 %v545, %v550
      %552 = vrot.lane.b32.xlu0 %v112, 48
      %v553 = vpop.permute.xlu0 %552
      %v556 = vsel %vm122, %v551, 0
      %558 = vmatprep.subr.mxu0 0.0
      %559 = vmatpush1.msra.mxu0 %v553
      %560 = vmatprep.subr.mxu0 0.0
      %561 = vmatpush1.msra.mxu0 0.0
      %562 = vmatprep.subr.mxu0 0.0
      %563 = vmatpush1.msra.mxu0 0.0
      %564 = vmatprep.subr.mxu0 0.0
      %565 = vmatpush1.msra.mxu0 0.0
      %566 = vmatprep.subr.mxu0 0.0
      %567 = vmatpush1.msra.mxu0 0.0
      %568 = vmatprep.subr.mxu0 0.0
      %569 = vmatpush1.msra.mxu0 0.0
      %570 = vmatprep.subr.mxu0 0.0
      %571 = vmatpush1.msra.mxu0 0.0
      %572 = vmatprep.subr.mxu0 0.0
      %573 = vmatpush1.msra.mxu0 0.0
      %574 = vmatprep.subr.mxu0 0.0
      %575 = vmatpush1.msra.mxu0 0.0
      %576 = vmatprep.subr.mxu0 0.0
      %577 = vmatpush1.msra.mxu0 0.0
      %578 = vmatprep.subr.mxu0 0.0
      %579 = vmatpush1.msra.mxu0 0.0
      %580 = vmatprep.subr.mxu0 0.0
      %581 = vmatpush1.msra.mxu0 0.0
      %582 = vmatprep.subr.mxu0 0.0
      %583 = vmatpush1.msra.mxu0 0.0
      %584 = vmatprep.subr.mxu0 0.0
      %585 = vmatpush1.msra.mxu0 0.0
      %586 = vmatprep.subr.mxu0 0.0
      %587 = vmatpush1.msra.mxu0 0.0
      %588 = vmatprep.subr.mxu0 0.0
      %589 = vmatpush1.msra.mxu0 0.0
      %590 = vmatprep.subr.mxu0 0.0
      %591 = vmatpush1.msra.mxu0 0.0
      %592 = vmatprep.subr.mxu0 0.0
      %593 = vmatpush1.msra.mxu0 0.0
      %594 = vmatprep.subr.mxu0 0.0
      %595 = vmatpush1.msra.mxu0 0.0
      %596 = vmatprep.subr.mxu0 0.0
      %597 = vmatpush1.msra.mxu0 0.0
      %598 = vmatprep.subr.mxu0 0.0
      %599 = vmatpush1.msra.mxu0 0.0
      %600 = vmatprep.subr.mxu0 0.0
      %601 = vmatpush1.msra.mxu0 0.0
      %602 = vmatprep.subr.mxu0 0.0
      %603 = vmatpush1.msra.mxu0 0.0
      %604 = vmatprep.subr.mxu0 0.0
      %605 = vmatpush1.msra.mxu0 0.0
      %606 = vmatprep.subr.mxu0 0.0
      %607 = vmatpush1.msra.mxu0 0.0
      %608 = vmatprep.subr.mxu0 0.0
      %609 = vmatpush1.msra.mxu0 0.0
      %610 = vmatprep.subr.mxu0 0.0
      %611 = vmatpush1.msra.mxu0 0.0
      %612 = vmatprep.subr.mxu0 0.0
      %613 = vmatpush1.msra.mxu0 0.0
      %614 = vmatprep.subr.mxu0 0.0
      %615 = vmatpush1.msra.mxu0 0.0
      %616 = vmatprep.subr.mxu0 0.0
      %617 = vmatpush1.msra.mxu0 0.0
      %618 = vmatprep.subr.mxu0 0.0
      %619 = vmatpush1.msra.mxu0 0.0
      %620 = vmatprep.subr.mxu0 0.0
      %621 = vmatpush1.msra.mxu0 0.0
      %622 = vmatprep.mubr.f32.mxu0 0.0
      %623 = vmatmul.mubr.f32.gmra.mrb[0].mxu0 %v556
      %v624 = vpop.f32.mrb[0].mxu0
      %v625 = vadd.f32 0.0, %v624
      %v626 = vpop.f32.mrb[0].mxu0
      %627 = vdwg.mxu0
      %629 = vrot.lane.b32.xlu0 %v625, 16
      %v630 = vpop.permute.xlu0 %629
      %vm632 = vcmask 195712
      %633 = vst.msk [vmem:[#allocation2] sm:$0xff] %vm632, %v630
      %634 = vrot.lane.b32.xlu0 %v118, 104
      %v635 = vpop.permute.xlu0 %634
      %636 = vrot.lane.b32.xlu0 %v112, 72
      %v637 = vpop.permute.xlu0 %636
      %v638 = vsel %vm122, %v635, 0
      %v640 = vsel %vm122, %v637, 0
      %642 = vmatprep.subr.mxu0 0.0
      %643 = vmatpush1.xpose.msra.mxu0 %v640
      %644 = vmatprep.subr.mxu0 0.0
      %645 = vmatpush1.xpose.msra.mxu0 0.0
      %646 = vmatprep.subr.mxu0 0.0
      %647 = vmatpush1.xpose.msra.mxu0 0.0
      %648 = vmatprep.subr.mxu0 0.0
      %649 = vmatpush1.xpose.msra.mxu0 0.0
      %650 = vmatprep.subr.mxu0 0.0
      %651 = vmatpush1.xpose.msra.mxu0 0.0
      %652 = vmatprep.subr.mxu0 0.0
      %653 = vmatpush1.xpose.msra.mxu0 0.0
      %654 = vmatprep.subr.mxu0 0.0
      %655 = vmatpush1.xpose.msra.mxu0 0.0
      %656 = vmatprep.subr.mxu0 0.0
      %657 = vmatpush1.xpose.msra.mxu0 0.0
      %658 = vmatprep.subr.mxu0 0.0
      %659 = vmatpush1.xpose.msra.mxu0 0.0
      %660 = vmatprep.subr.mxu0 0.0
      %661 = vmatpush1.xpose.msra.mxu0 0.0
      %662 = vmatprep.subr.mxu0 0.0
      %663 = vmatpush1.xpose.msra.mxu0 0.0
      %664 = vmatprep.subr.mxu0 0.0
      %665 = vmatpush1.xpose.msra.mxu0 0.0
      %666 = vmatprep.subr.mxu0 0.0
      %667 = vmatpush1.xpose.msra.mxu0 0.0
      %668 = vmatprep.subr.mxu0 0.0
      %669 = vmatpush1.xpose.msra.mxu0 0.0
      %670 = vmatprep.subr.mxu0 0.0
      %671 = vmatpush1.xpose.msra.mxu0 0.0
      %672 = vmatprep.subr.mxu0 0.0
      %673 = vmatpush1.xpose.msra.mxu0 0.0
      %674 = vmatprep.subr.mxu0 0.0
      %675 = vmatpush1.xpose.msra.mxu0 0.0
      %676 = vmatprep.subr.mxu0 0.0
      %677 = vmatpush1.xpose.msra.mxu0 0.0
      %678 = vmatprep.subr.mxu0 0.0
      %679 = vmatpush1.xpose.msra.mxu0 0.0
      %680 = vmatprep.subr.mxu0 0.0
      %681 = vmatpush1.xpose.msra.mxu0 0.0
      %682 = vmatprep.subr.mxu0 0.0
      %683 = vmatpush1.xpose.msra.mxu0 0.0
      %684 = vmatprep.subr.mxu0 0.0
      %685 = vmatpush1.xpose.msra.mxu0 0.0
      %686 = vmatprep.subr.mxu0 0.0
      %687 = vmatpush1.xpose.msra.mxu0 0.0
      %688 = vmatprep.subr.mxu0 0.0
      %689 = vmatpush1.xpose.msra.mxu0 0.0
      %690 = vmatprep.subr.mxu0 0.0
      %691 = vmatpush1.xpose.msra.mxu0 0.0
      %692 = vmatprep.subr.mxu0 0.0
      %693 = vmatpush1.xpose.msra.mxu0 0.0
      %694 = vmatprep.subr.mxu0 0.0
      %695 = vmatpush1.xpose.msra.mxu0 0.0
      %696 = vmatprep.subr.mxu0 0.0
      %697 = vmatpush1.xpose.msra.mxu0 0.0
      %698 = vmatprep.subr.mxu0 0.0
      %699 = vmatpush1.xpose.msra.mxu0 0.0
      %700 = vmatprep.subr.mxu0 0.0
      %701 = vmatpush1.xpose.msra.mxu0 0.0
      %702 = vmatprep.subr.mxu0 0.0
      %703 = vmatpush1.xpose.msra.mxu0 0.0
      %704 = vmatprep.subr.mxu0 0.0
      %705 = vmatpush1.xpose.msra.mxu0 0.0
      %706 = vmatprep.mubr.f32.mxu0 0.0
      %707 = vmatmul.mubr.f32.gmra.mrb[0].mxu0 %v638
      %v708 = vpop.f32.mrb[0].mxu0
      %v709 = vadd.f32 0.0, %v708
      %v710 = vpop.f32.mrb[0].mxu0
      %711 = vdwg.mxu0
      %v712 = vsel %vm117, -inf, %v709
      %v713 = vsel %vm122, %v712, -inf
      %714 = vmax.xlane.f32.xlu0 %v713
      %v715 = vpop.xlane.xlu0 %714
      %v716 = vsub.f32 %v712, %v715
      %v717 = vmul.f32 %v716, 1.442695
      %v718 = vpow.pop %v717
      %v719 = vsel %vm122, %v718, 0.0
      %720 = vadd.xlane.f32.xlu0 %v719
      %v721 = vpop.xlane.xlu0 %720
      %v722 = vrcp.pop %v721
      %v723 = vmul.f32 1.0, %v722
      %v724 = vmul.f32 %v718, %v723
      %725 = vrot.lane.b32.xlu0 %v112, 40
      %v726 = vpop.permute.xlu0 %725
      %v729 = vsel %vm122, %v724, 0
      %731 = vmatprep.subr.mxu0 0.0
      %732 = vmatpush1.msra.mxu0 %v726
      %733 = vmatprep.subr.mxu0 0.0
      %734 = vmatpush1.msra.mxu0 0.0
      %735 = vmatprep.subr.mxu0 0.0
      %736 = vmatpush1.msra.mxu0 0.0
      %737 = vmatprep.subr.mxu0 0.0
      %738 = vmatpush1.msra.mxu0 0.0
      %739 = vmatprep.subr.mxu0 0.0
      %740 = vmatpush1.msra.mxu0 0.0
      %741 = vmatprep.subr.mxu0 0.0
      %742 = vmatpush1.msra.mxu0 0.0
      %743 = vmatprep.subr.mxu0 0.0
      %744 = vmatpush1.msra.mxu0 0.0
      %745 = vmatprep.subr.mxu0 0.0
      %746 = vmatpush1.msra.mxu0 0.0
      %747 = vmatprep.subr.mxu0 0.0
      %748 = vmatpush1.msra.mxu0 0.0
      %749 = vmatprep.subr.mxu0 0.0
      %750 = vmatpush1.msra.mxu0 0.0
      %751 = vmatprep.subr.mxu0 0.0
      %752 = vmatpush1.msra.mxu0 0.0
      %753 = vmatprep.subr.mxu0 0.0
      %754 = vmatpush1.msra.mxu0 0.0
      %755 = vmatprep.subr.mxu0 0.0
      %756 = vmatpush1.msra.mxu0 0.0
      %757 = vmatprep.subr.mxu0 0.0
      %758 = vmatpush1.msra.mxu0 0.0
      %759 = vmatprep.subr.mxu0 0.0
      %760 = vmatpush1.msra.mxu0 0.0
      %761 = vmatprep.subr.mxu0 0.0
      %762 = vmatpush1.msra.mxu0 0.0
      %763 = vmatprep.subr.mxu0 0.0
      %764 = vmatpush1.msra.mxu0 0.0
      %765 = vmatprep.subr.mxu0 0.0
      %766 = vmatpush1.msra.mxu0 0.0
      %767 = vmatprep.subr.mxu0 0.0
      %768 = vmatpush1.msra.mxu0 0.0
      %769 = vmatprep.subr.mxu0 0.0
      %770 = vmatpush1.msra.mxu0 0.0
      %771 = vmatprep.subr.mxu0 0.0
      %772 = vmatpush1.msra.mxu0 0.0
      %773 = vmatprep.subr.mxu0 0.0
      %774 = vmatpush1.msra.mxu0 0.0
      %775 = vmatprep.subr.mxu0 0.0
      %776 = vmatpush1.msra.mxu0 0.0
      %777 = vmatprep.subr.mxu0 0.0
      %778 = vmatpush1.msra.mxu0 0.0
      %779 = vmatprep.subr.mxu0 0.0
      %780 = vmatpush1.msra.mxu0 0.0
      %781 = vmatprep.subr.mxu0 0.0
      %782 = vmatpush1.msra.mxu0 0.0
      %783 = vmatprep.subr.mxu0 0.0
      %784 = vmatpush1.msra.mxu0 0.0
      %785 = vmatprep.subr.mxu0 0.0
      %786 = vmatpush1.msra.mxu0 0.0
      %787 = vmatprep.subr.mxu0 0.0
      %788 = vmatpush1.msra.mxu0 0.0
      %789 = vmatprep.subr.mxu0 0.0
      %790 = vmatpush1.msra.mxu0 0.0
      %791 = vmatprep.subr.mxu0 0.0
      %792 = vmatpush1.msra.mxu0 0.0
      %793 = vmatprep.subr.mxu0 0.0
      %794 = vmatpush1.msra.mxu0 0.0
      %795 = vmatprep.mubr.f32.mxu0 0.0
      %796 = vmatmul.mubr.f32.gmra.mrb[0].mxu0 %v729
      %v797 = vpop.f32.mrb[0].mxu0
      %v798 = vadd.f32 0.0, %v797
      %v799 = vpop.f32.mrb[0].mxu0
      %800 = vdwg.mxu0
      %802 = vrot.lane.b32.xlu0 %v798, 24
      %v803 = vpop.permute.xlu0 %802
      %vm805 = vcmask 261312
      %806 = vst.msk [vmem:[#allocation2] sm:$0xff] %vm805, %v803
      %v807 = vld [vmem:[#allocation2] sm:$0xff]
      %vm808 = vcmask 261120
      %809 = vst.msk [vmem:[%s111] sm:$0xff] %vm808, %v807
      %p810 = scmp.lt.s32.totalorder %s12, 1
      %s811 = scalar_select %p810, %s12, 1
      %s812 = smul.addr %s811, 8
      %s813 = scalar_lea.vmem %s1, %s812
      // Predicated region
      $region25: #{_lambda_.10} parent=23 // pred_check
        %p814 = pneg %p56
      $region26: #{_lambda_.10} parent=23 // pred_check_branch
        %816 = sbr.rel (%p814) target = $region28
      $region27: #{_lambda_.10} parent=23 // pred_region
        _
      $region28: #{_lambda_.10} parent=23 // pred_fallthru
        _
    $region24: #{_lambda_.10} parent=5 // pred_fallthru
      _
    %p817 = scmp.le.s32.totalorder 2, %s7
    // Predicated region
    $region29: #{_lambda_.10} parent=5 // pred_check
      %p818 = pneg %p817
    $region30: #{_lambda_.10} parent=5 // pred_check_branch
      %820 = sbr.rel (%p818) target = $region32
    $region31: #{_lambda_.10} parent=5 // pred_region
      %s821 = ssub.s32 %s7, 2
      // Predicated region
      $region33: #{_lambda_.10} parent=31 // pred_check
        %p822 = pneg %p62
      $region34: #{_lambda_.10} parent=31 // pred_check_branch
        %824 = sbr.rel (%p822) target = $region36
      $region35: #{_lambda_.10} parent=31 // pred_region
        %p825 = scmp.lt.s32.totalorder %s13, 1
        %s826 = scalar_select %p825, %s13, 1
        %s827 = smul.addr %s826, 8
        %s828 = scalar_lea.vmem %s1, %s827
      $region36: #{_lambda_.10} parent=31 // pred_fallthru
        _
    $region32: #{_lambda_.10} parent=5 // pred_fallthru
      _
  $region6: #{_lambda_.10} parent=0 // loop_footer
    %s11 = sadd.s32 1, %s7
  $region7: #{_lambda_.10} parent=0 // loop_footer_branch
    %6 = sbr.rel target = $region3
  $region8: #{_lambda_.10} parent=0 // loop_exit
    _

// kernel: _lambda_.12
$region0: #{_lambda_.12}
  #allocation0 [shape = 'u32[]', space=smem, size = 0x4, offset = 0x4, fixed_abs, tag = 'smem constant byte address 0x4 - core index']
  #allocation1 [shape = 'u32[144,128]{1,0:T(1,128)}', space=vmem, size = 0x12000, scoped, tag = 'internal scratch']
  #allocation2 [shape = 'f32[16,32]{1,0:T(8,128)}', space=vmem, size = 0x2000, scoped, tag = 'scratch operand']
  #allocation3 [shape = 'f32[16,32]{1,0:T(8,128)}', space=vmem, size = 0x2000, scoped, tag = 'scratch operand']
  %s0 = inlined_call_operand.vmem [shape: f32[16,32], index: 0, kind: input, shape index: {}]
  %s1 = inlined_call_operand.vmem [shape: f32[1,32], index: 1, kind: input, shape index: {}]
  %s2 = inlined_call_operand.vmem [shape: f32[1,32], index: 2, kind: input, shape index: {}]
  %s3 = inlined_call_operand.vmem [shape: f32[32,128], index: 3, kind: input, shape index: {}]
  %s4 = inlined_call_operand.vmem [shape: f32[1,128], index: 4, kind: input, shape index: {}]
  %s5 = inlined_call_operand.vmem [shape: f32[128,32], index: 5, kind: input, shape index: {}]
  %s6 = inlined_call_operand.vmem [shape: f32[1,32], index: 6, kind: input, shape index: {}]
  %s7 = inlined_call_operand.vmem [shape: f32[16,32], index: 7, kind: output, shape index: {}]
  %s8 = sld [smem:[#allocation0]]
  $region46: #{_lambda_.12} parent=0
    _
  %s10 = ssub.s32 1, %s8
  %s11 = scalar_select 0, %s10, %s8
  // Predicated region
  $region2: #{_lambda_.12} parent=0 // pred_check
    _
  $region3: #{_lambda_.12} parent=0 // pred_check_branch
    %13 = sbr.rel (0) target = $region5
  $region4: #{_lambda_.12} parent=0 // pred_region
    _
  $region5: #{_lambda_.12} parent=0 // pred_fallthru
    _
  // Predicated region
  $region6: #{_lambda_.12} parent=0 // pred_check
    _
  $region7: #{_lambda_.12} parent=0 // pred_check_branch
    %15 = sbr.rel (0) target = $region9
  $region8: #{_lambda_.12} parent=0 // pred_region
    _
  $region9: #{_lambda_.12} parent=0 // pred_fallthru
    _
  // Predicated region
  $region10: #{_lambda_.12} parent=0 // pred_check
    _
  $region11: #{_lambda_.12} parent=0 // pred_check_branch
    %17 = sbr.rel (0) target = $region13
  $region12: #{_lambda_.12} parent=0 // pred_region
    _
  $region13: #{_lambda_.12} parent=0 // pred_fallthru
    _
  // Predicated region
  $region14: #{_lambda_.12} parent=0 // pred_check
    _
  $region15: #{_lambda_.12} parent=0 // pred_check_branch
    %19 = sbr.rel (0) target = $region17
  $region16: #{_lambda_.12} parent=0 // pred_region
    _
  $region17: #{_lambda_.12} parent=0 // pred_fallthru
    _
  // Predicated region
  $region18: #{_lambda_.12} parent=0 // pred_check
    _
  $region19: #{_lambda_.12} parent=0 // pred_check_branch
    %21 = sbr.rel (0) target = $region21
  $region20: #{_lambda_.12} parent=0 // pred_region
    _
  $region21: #{_lambda_.12} parent=0 // pred_fallthru
    _
  // Predicated region
  $region22: #{_lambda_.12} parent=0 // pred_check
    _
  $region23: #{_lambda_.12} parent=0 // pred_check_branch
    %23 = sbr.rel (0) target = $region25
  $region24: #{_lambda_.12} parent=0 // pred_region
    _
  $region25: #{_lambda_.12} parent=0 // pred_fallthru
    _
  // Predicated region
  $region26: #{_lambda_.12} parent=0 // pred_check
    _
  $region27: #{_lambda_.12} parent=0 // pred_check_branch
    %25 = sbr.rel (0) target = $region29
  $region28: #{_lambda_.12} parent=0 // pred_region
    _
  $region29: #{_lambda_.12} parent=0 // pred_fallthru
    _
  %p26 = scmp.eq.s32.totalorder 0, 0
  // Predicated region
  $region30: #{_lambda_.12} parent=0 // pred_check
    %p27 = pneg %p26
  $region31: #{_lambda_.12} parent=0 // pred_check_branch
    %29 = sbr.rel (%p27) target = $region33
  $region32: #{_lambda_.12} parent=0 // pred_region
    %v30 = vld [vmem:[%s0] sm:$0xff]
    %v31 = vld [vmem:[%s0 + $0x8] sm:$0xff]
    %v32 = vld [vmem:[%s1] sm:$0x1]
    %v33 = vld [vmem:[%s2] sm:$0x1]
    %vm34 = vcmask 261120
    %v35 = vsel %vm34, %v30, 0.0
    %36 = vadd.xlane.f32.xlu0 %v35
    %v37 = vpop.xlane.xlu0 %36
    %v38 = vsel %vm34, %v31, 0.0
    %39 = vadd.xlane.f32.xlu0 %v38
    %v40 = vpop.xlane.xlu0 %39
    %v41 = vrcp.pop 32.0
    %v42 = vmul.f32 %v37, %v41
    %v43 = vmul.f32 %v40, %v41
    %v44 = vsub.f32 %v30, %v42
    %v45 = vsub.f32 %v31, %v43
    %v46 = vmul.f32 %v44, %v44
    %v47 = vmul.f32 %v45, %v45
    %v48 = vsel %vm34, %v46, 0.0
    %49 = vadd.xlane.f32.xlu0 %v48
    %v50 = vpop.xlane.xlu0 %49
    %v51 = vsel %vm34, %v47, 0.0
    %52 = vadd.xlane.f32.xlu0 %v51
    %v53 = vpop.xlane.xlu0 %52
    %v54 = vmul.f32 %v50, %v41
    %v55 = vmul.f32 %v53, %v41
    %v56 = vadd.f32 %v54, 1e-05
    %v57 = vadd.f32 %v55, 1e-05
    %v58 = vrsqrt.pop %v56
    %v59 = vrsqrt.pop %v57
    %v60 = vmul.f32 %v44, %v58
    %v61 = vmul.f32 %v45, %v59
    %v63 = vlaneseq
    %v64 = vshrl.u32 %v63, 7
    %v65 = vsub.s32 0, %v64
    %v66 = vrot.slane %v32, %v65
    %v68 = vmul.f32 %v60, %v66
    %v69 = vmul.f32 %v61, %v66
    %v71 = vlaneseq
    %v72 = vshrl.u32 %v71, 7
    %v73 = vsub.s32 0, %v72
    %v74 = vrot.slane %v33, %v73
    %v76 = vadd.f32 %v68, %v74
    %v77 = vadd.f32 %v69, %v74
    %78 = vst.msk [vmem:[#allocation2] sm:$0xff] %vm34, %v76
    %79 = vst.msk [vmem:[#allocation2 + $0x8] sm:$0xff] %vm34, %v77
    %80 = vst.msk [vmem:[#allocation3] sm:$0xff] %vm34, 0.0
    %81 = vst.msk [vmem:[#allocation3 + $0x8] sm:$0xff] %vm34, 0.0
  $region33: #{_lambda_.12} parent=0 // pred_fallthru
    _
  %v82 = vld [vmem:[#allocation2] sm:$0xff]
  %v83 = vld [vmem:[#allocation2 + $0x8] sm:$0xff]
  %v84 = vld [vmem:[%s3] sm:$0xff]
  %v85 = vld [vmem:[%s3 + $0x8] sm:$0xff]
  %v86 = vld [vmem:[%s3 + $0x10] sm:$0xff]
  %v87 = vld [vmem:[%s3 + $0x18] sm:$0xff]
  %v88 = vld [vmem:[%s4] sm:$0x1]
  %v90 = vlaneseq
  %v91 = vshrl.u32 %v90, 7
  %v92 = vsub.s32 0, %v91
  %v93 = vrot.slane %v88, %v92
  %vm95 = vcmask 261120
  %v97 = vsel %vm95, %v82, 0
  %v100 = vsel %vm95, %v83, 0
  %102 = vmatprep.subr.mxu0 0.0
  %103 = vmatpush1.msra.mxu0 %v84
  %104 = vmatprep.subr.mxu0 0.0
  %105 = vmatpush1.msra.mxu0 %v85
  %106 = vmatprep.subr.mxu0 0.0
  %107 = vmatpush1.msra.mxu0 %v86
  %108 = vmatprep.subr.mxu0 0.0
  %109 = vmatpush1.msra.mxu0 %v87
  %110 = vmatprep.subr.mxu0 0.0
  %111 = vmatpush1.msra.mxu0 0.0
  %112 = vmatprep.subr.mxu0 0.0
  %113 = vmatpush1.msra.mxu0 0.0
  %114 = vmatprep.subr.mxu0 0.0
  %115 = vmatpush1.msra.mxu0 0.0
  %116 = vmatprep.subr.mxu0 0.0
  %117 = vmatpush1.msra.mxu0 0.0
  %118 = vmatprep.subr.mxu0 0.0
  %119 = vmatpush1.msra.mxu0 0.0
  %120 = vmatprep.subr.mxu0 0.0
  %121 = vmatpush1.msra.mxu0 0.0
  %122 = vmatprep.subr.mxu0 0.0
  %123 = vmatpush1.msra.mxu0 0.0
  %124 = vmatprep.subr.mxu0 0.0
  %125 = vmatpush1.msra.mxu0 0.0
  %126 = vmatprep.subr.mxu0 0.0
  %127 = vmatpush1.msra.mxu0 0.0
  %128 = vmatprep.subr.mxu0 0.0
  %129 = vmatpush1.msra.mxu0 0.0
  %130 = vmatprep.subr.mxu0 0.0
  %131 = vmatpush1.msra.mxu0 0.0
  %132 = vmatprep.subr.mxu0 0.0
  %133 = vmatpush1.msra.mxu0 0.0
  %134 = vmatprep.subr.mxu0 0.0
  %135 = vmatpush1.msra.mxu0 0.0
  %136 = vmatprep.subr.mxu0 0.0
  %137 = vmatpush1.msra.mxu0 0.0
  %138 = vmatprep.subr.mxu0 0.0
  %139 = vmatpush1.msra.mxu0 0.0
  %140 = vmatprep.subr.mxu0 0.0
  %141 = vmatpush1.msra.mxu0 0.0
  %142 = vmatprep.subr.mxu0 0.0
  %143 = vmatpush1.msra.mxu0 0.0
  %144 = vmatprep.subr.mxu0 0.0
  %145 = vmatpush1.msra.mxu0 0.0
  %146 = vmatprep.subr.mxu0 0.0
  %147 = vmatpush1.msra.mxu0 0.0
  %148 = vmatprep.subr.mxu0 0.0
  %149 = vmatpush1.msra.mxu0 0.0
  %150 = vmatprep.subr.mxu0 0.0
  %151 = vmatpush1.msra.mxu0 0.0
  %152 = vmatprep.subr.mxu0 0.0
  %153 = vmatpush1.msra.mxu0 0.0
  %154 = vmatprep.subr.mxu0 0.0
  %155 = vmatpush1.msra.mxu0 0.0
  %156 = vmatprep.subr.mxu0 0.0
  %157 = vmatpush1.msra.mxu0 0.0
  %158 = vmatprep.subr.mxu0 0.0
  %159 = vmatpush1.msra.mxu0 0.0
  %160 = vmatprep.subr.mxu0 0.0
  %161 = vmatpush1.msra.mxu0 0.0
  %162 = vmatprep.subr.mxu0 0.0
  %163 = vmatpush1.msra.mxu0 0.0
  %164 = vmatprep.subr.mxu0 0.0
  %165 = vmatpush1.msra.mxu0 0.0
  %166 = vmatprep.mubr.f32.mxu0 0.0
  %167 = vmatmul.mubr.f32.gmra.mrb[0].mxu0 %v97
  %v168 = vpop.f32.mrb[0].mxu0
  %v169 = vadd.f32 %v93, %v168
  %v170 = vpop.f32.mrb[0].mxu0
  %171 = vmatprep.mubr.f32.mxu0 0.0
  %172 = vmatmul.mubr.f32.gmra.mrb[0].mxu0 %v100
  %v173 = vpop.f32.mrb[0].mxu0
  %v174 = vadd.f32 %v93, %v173
  %v175 = vpop.f32.mrb[0].mxu0
  %176 = vdwg.mxu0
  %v177 = vmul.f32 %v169, 0.5
  %v178 = vmul.f32 %v174, 0.5
  %v179 = vmul.f32 %v169, %v169
  %v180 = vmul.f32 %v174, %v174
  %v181 = vmul.f32 %v169, %v179
  %v182 = vmul.f32 %v174, %v180
  %v183 = vmul.f32 %v181, 0.044715
  %v184 = vmul.f32 %v182, 0.044715
  %v185 = vadd.f32 %v169, %v183
  %v186 = vadd.f32 %v174, %v184
  %v187 = vmul.f32 %v185, 0.7978846
  %v188 = vmul.f32 %v186, 0.7978846
  %v189 = vtanh.pop %v187
  %v190 = vtanh.pop %v188
  %v191 = vadd.f32 %v189, 1.0
  %v192 = vadd.f32 %v190, 1.0
  %v193 = vmul.f32 %v177, %v191
  %v194 = vmul.f32 %v178, %v192
  %v195 = vld [vmem:[#allocation3] sm:$0xff]
  %v196 = vld [vmem:[#allocation3 + $0x8] sm:$0xff]
  %v197 = vld [vmem:[%s5] sm:$0xff]
  %v198 = vld [vmem:[%s5 + $0x8] sm:$0xff]
  %v199 = vld [vmem:[%s5 + $0x10] sm:$0xff]
  %v200 = vld [vmem:[%s5 + $0x18] sm:$0xff]
  %v201 = vld [vmem:[%s5 + $0x20] sm:$0xff]
  %v202 = vld [vmem:[%s5 + $0x28] sm:$0xff]
  %v203 = vld [vmem:[%s5 + $0x30] sm:$0xff]
  %v204 = vld [vmem:[%s5 + $0x38] sm:$0xff]
  %v205 = vld [vmem:[%s5 + $0x40] sm:$0xff]
  %v206 = vld [vmem:[%s5 + $0x48] sm:$0xff]
  %v207 = vld [vmem:[%s5 + $0x50] sm:$0xff]
  %v208 = vld [vmem:[%s5 + $0x58] sm:$0xff]
  %v209 = vld [vmem:[%s5 + $0x60] sm:$0xff]
  %v210 = vld [vmem:[%s5 + $0x68] sm:$0xff]
  %v211 = vld [vmem:[%s5 + $0x70] sm:$0xff]
  %v212 = vld [vmem:[%s5 + $0x78] sm:$0xff]
  %213 = vmatprep.subr.mxu0 0.0
  %214 = vmatpush1.msra.mxu0 %v197
  %215 = vmatprep.subr.mxu0 0.0
  %216 = vmatpush1.msra.mxu0 %v198
  %217 = vmatprep.subr.mxu0 0.0
  %218 = vmatpush1.msra.mxu0 %v199
  %219 = vmatprep.subr.mxu0 0.0
  %220 = vmatpush1.msra.mxu0 %v200
  %221 = vmatprep.subr.mxu0 0.0
  %222 = vmatpush1.msra.mxu0 %v201
  %223 = vmatprep.subr.mxu0 0.0
  %224 = vmatpush1.msra.mxu0 %v202
  %225 = vmatprep.subr.mxu0 0.0
  %226 = vmatpush1.msra.mxu0 %v203
  %227 = vmatprep.subr.mxu0 0.0
  %228 = vmatpush1.msra.mxu0 %v204
  %229 = vmatprep.subr.mxu0 0.0
  %230 = vmatpush1.msra.mxu0 %v205
  %231 = vmatprep.subr.mxu0 0.0
  %232 = vmatpush1.msra.mxu0 %v206
  %233 = vmatprep.subr.mxu0 0.0
  %234 = vmatpush1.msra.mxu0 %v207
  %235 = vmatprep.subr.mxu0 0.0
  %236 = vmatpush1.msra.mxu0 %v208
  %237 = vmatprep.subr.mxu0 0.0
  %238 = vmatpush1.msra.mxu0 %v209
  %239 = vmatprep.subr.mxu0 0.0
  %240 = vmatpush1.msra.mxu0 %v210
  %241 = vmatprep.subr.mxu0 0.0
  %242 = vmatpush1.msra.mxu0 %v211
  %243 = vmatprep.subr.mxu0 0.0
  %244 = vmatpush1.msra.mxu0 %v212
  %245 = vmatprep.subr.mxu0 0.0
  %246 = vmatpush1.msra.mxu0 0.0
  %247 = vmatprep.subr.mxu0 0.0
  %248 = vmatpush1.msra.mxu0 0.0
  %249 = vmatprep.subr.mxu0 0.0
  %250 = vmatpush1.msra.mxu0 0.0
  %251 = vmatprep.subr.mxu0 0.0
  %252 = vmatpush1.msra.mxu0 0.0
  %253 = vmatprep.subr.mxu0 0.0
  %254 = vmatpush1.msra.mxu0 0.0
  %255 = vmatprep.subr.mxu0 0.0
  %256 = vmatpush1.msra.mxu0 0.0
  %257 = vmatprep.subr.mxu0 0.0
  %258 = vmatpush1.msra.mxu0 0.0
  %259 = vmatprep.subr.mxu0 0.0
  %260 = vmatpush1.msra.mxu0 0.0
  %261 = vmatprep.subr.mxu0 0.0
  %262 = vmatpush1.msra.mxu0 0.0
  %263 = vmatprep.subr.mxu0 0.0
  %264 = vmatpush1.msra.mxu0 0.0
  %265 = vmatprep.subr.mxu0 0.0
  %266 = vmatpush1.msra.mxu0 0.0
  %267 = vmatprep.subr.mxu0 0.0
  %268 = vmatpush1.msra.mxu0 0.0
  %269 = vmatprep.subr.mxu0 0.0
  %270 = vmatpush1.msra.mxu0 0.0
  %271 = vmatprep.subr.mxu0 0.0
  %272 = vmatpush1.msra.mxu0 0.0
  %273 = vmatprep.subr.mxu0 0.0
  %274 = vmatpush1.msra.mxu0 0.0
  %275 = vmatprep.subr.mxu0 0.0
  %276 = vmatpush1.msra.mxu0 0.0
  %277 = vmatprep.mubr.f32.mxu0 0.0
  %278 = vmatmul.mubr.f32.gmra.mrb[0].mxu0 %v193
  %v279 = vpop.f32.mrb[0].mxu0
  %v280 = vadd.f32 0.0, %v279
  %v281 = vpop.f32.mrb[0].mxu0
  %282 = vmatprep.mubr.f32.mxu0 0.0
  %283 = vmatmul.mubr.f32.gmra.mrb[0].mxu0 %v194
  %v284 = vpop.f32.mrb[0].mxu0
  %v285 = vadd.f32 0.0, %v284
  %v286 = vpop.f32.mrb[0].mxu0
  %287 = vdwg.mxu0
  %v288 = vadd.f32 %v195, %v280
  %v289 = vadd.f32 %v196, %v285
  %290 = vst.msk [vmem:[#allocation3] sm:$0xff] %vm95, %v288
  %291 = vst.msk [vmem:[#allocation3 + $0x8] sm:$0xff] %vm95, %v289
  // Predicated region
  $region34: #{_lambda_.12} parent=0 // pred_check
    %p292 = pneg %p26
  $region35: #{_lambda_.12} parent=0 // pred_check_branch
    %294 = sbr.rel (%p292) target = $region37
  $region36: #{_lambda_.12} parent=0 // pred_region
    %v295 = vld [vmem:[%s0] sm:$0xff]
    %v296 = vld [vmem:[%s0 + $0x8] sm:$0xff]
    %v297 = vld [vmem:[#allocation3] sm:$0xff]
    %v298 = vld [vmem:[#allocation3 + $0x8] sm:$0xff]
    %v299 = vadd.f32 %v295, %v297
    %v300 = vadd.f32 %v296, %v298
    %v301 = vld [vmem:[%s6] sm:$0x1]
    %v303 = vlaneseq
    %v304 = vshrl.u32 %v303, 7
    %v305 = vsub.s32 0, %v304
    %v306 = vrot.slane %v301, %v305
    %v308 = vadd.f32 %v299, %v306
    %v309 = vadd.f32 %v300, %v306
    %310 = vst.msk [vmem:[%s7] sm:$0xff] %vm95, %v308
    %311 = vst.msk [vmem:[%s7 + $0x8] sm:$0xff] %vm95, %v309
  $region37: #{_lambda_.12} parent=0 // pred_fallthru
    _
  // Predicated region
  $region38: #{_lambda_.12} parent=0 // pred_check
    _
  $region39: #{_lambda_.12} parent=0 // pred_check_branch
    %313 = sbr.rel (0) target = $region41
  $region40: #{_lambda_.12} parent=0 // pred_region
    _
  $region41: #{_lambda_.12} parent=0 // pred_fallthru
    _
  // Predicated region
  $region42: #{_lambda_.12} parent=0 // pred_check
    _
  $region43: #{_lambda_.12} parent=0 // pred_check_branch
    %315 = sbr.rel (0) target = $region45
  $region44: #{_lambda_.12} parent=0 // pred_region
    _
  $region45: #{_lambda_.12} parent=0 // pred_fallthru
    _

// kernel: _lambda_.17
$region0: #{_lambda_.17}
  #allocation0 [shape = 'u32[]', space=smem, size = 0x4, offset = 0x4, fixed_abs, tag = 'smem constant byte address 0x4 - core index']
  #allocation1 [shape = 'u32[144,128]{1,0:T(1,128)}', space=vmem, size = 0x12000, scoped, tag = 'internal scratch']
  %s0 = inlined_call_operand.vmem [shape: f32[16,32], index: 0, kind: input, shape index: {}]
  %s1 = inlined_call_operand.vmem [shape: f32[1,32], index: 1, kind: input, shape index: {}]
  %s2 = inlined_call_operand.vmem [shape: f32[1,32], index: 2, kind: input, shape index: {}]
  %s3 = inlined_call_operand.vmem [shape: f32[32,128], index: 3, kind: input, shape index: {}]
  %s4 = inlined_call_operand.vmem [shape: f32[16,128], index: 4, kind: output, shape index: {}]
  %s5 = sld [smem:[#allocation0]]
  $region26: #{_lambda_.17} parent=0
    _
  %s7 = ssub.s32 1, %s5
  %s8 = scalar_select 0, %s7, %s5
  // Predicated region
  $region2: #{_lambda_.17} parent=0 // pred_check
    _
  $region3: #{_lambda_.17} parent=0 // pred_check_branch
    %10 = sbr.rel (0) target = $region5
  $region4: #{_lambda_.17} parent=0 // pred_region
    _
  $region5: #{_lambda_.17} parent=0 // pred_fallthru
    _
  // Predicated region
  $region6: #{_lambda_.17} parent=0 // pred_check
    _
  $region7: #{_lambda_.17} parent=0 // pred_check_branch
    %12 = sbr.rel (0) target = $region9
  $region8: #{_lambda_.17} parent=0 // pred_region
    _
  $region9: #{_lambda_.17} parent=0 // pred_fallthru
    _
  // Predicated region
  $region10: #{_lambda_.17} parent=0 // pred_check
    _
  $region11: #{_lambda_.17} parent=0 // pred_check_branch
    %14 = sbr.rel (0) target = $region13
  $region12: #{_lambda_.17} parent=0 // pred_region
    _
  $region13: #{_lambda_.17} parent=0 // pred_fallthru
    _
  // Predicated region
  $region14: #{_lambda_.17} parent=0 // pred_check
    _
  $region15: #{_lambda_.17} parent=0 // pred_check_branch
    %16 = sbr.rel (0) target = $region17
  $region16: #{_lambda_.17} parent=0 // pred_region
    _
  $region17: #{_lambda_.17} parent=0 // pred_fallthru
    _
  %v17 = vld [vmem:[%s0] sm:$0xff]
  %v18 = vld [vmem:[%s0 + $0x8] sm:$0xff]
  %v19 = vld [vmem:[%s1] sm:$0x1]
  %v20 = vld [vmem:[%s2] sm:$0x1]
  %vm21 = vcmask 261120
  %v22 = vsel %vm21, %v17, 0.0
  %23 = vadd.xlane.f32.xlu0 %v22
  %v24 = vpop.xlane.xlu0 %23
  %v25 = vsel %vm21, %v18, 0.0
  %26 = vadd.xlane.f32.xlu0 %v25
  %v27 = vpop.xlane.xlu0 %26
  %v28 = vrcp.pop 32.0
  %v29 = vmul.f32 %v24, %v28
  %v30 = vmul.f32 %v27, %v28
  %v31 = vsub.f32 %v17, %v29
  %v32 = vsub.f32 %v18, %v30
  %v33 = vmul.f32 %v31, %v31
  %v34 = vmul.f32 %v32, %v32
  %v35 = vsel %vm21, %v33, 0.0
  %36 = vadd.xlane.f32.xlu0 %v35
  %v37 = vpop.xlane.xlu0 %36
  %v38 = vsel %vm21, %v34, 0.0
  %39 = vadd.xlane.f32.xlu0 %v38
  %v40 = vpop.xlane.xlu0 %39
  %v41 = vmul.f32 %v37, %v28
  %v42 = vmul.f32 %v40, %v28
  %v43 = vadd.f32 %v41, 1e-05
  %v44 = vadd.f32 %v42, 1e-05
  %v45 = vrsqrt.pop %v43
  %v46 = vrsqrt.pop %v44
  %v47 = vmul.f32 %v31, %v45
  %v48 = vmul.f32 %v32, %v46
  %v50 = vlaneseq
  %v51 = vshrl.u32 %v50, 7
  %v52 = vsub.s32 0, %v51
  %v53 = vrot.slane %v19, %v52
  %v55 = vmul.f32 %v47, %v53
  %v56 = vmul.f32 %v48, %v53
  %v58 = vlaneseq
  %v59 = vshrl.u32 %v58, 7
  %v60 = vsub.s32 0, %v59
  %v61 = vrot.slane %v20, %v60
  %v63 = vadd.f32 %v55, %v61
  %v64 = vadd.f32 %v56, %v61
  %v65 = vld [vmem:[%s3] sm:$0xff]
  %v66 = vld [vmem:[%s3 + $0x8] sm:$0xff]
  %v67 = vld [vmem:[%s3 + $0x10] sm:$0xff]
  %v68 = vld [vmem:[%s3 + $0x18] sm:$0xff]
  %v70 = vsel %vm21, %v63, 0
  %v73 = vsel %vm21, %v64, 0
  %75 = vmatprep.subr.mxu0 0.0
  %76 = vmatpush1.msra.mxu0 %v65
  %77 = vmatprep.subr.mxu0 0.0
  %78 = vmatpush1.msra.mxu0 %v66
  %79 = vmatprep.subr.mxu0 0.0
  %80 = vmatpush1.msra.mxu0 %v67
  %81 = vmatprep.subr.mxu0 0.0
  %82 = vmatpush1.msra.mxu0 %v68
  %83 = vmatprep.subr.mxu0 0.0
  %84 = vmatpush1.msra.mxu0 0.0
  %85 = vmatprep.subr.mxu0 0.0
  %86 = vmatpush1.msra.mxu0 0.0
  %87 = vmatprep.subr.mxu0 0.0
  %88 = vmatpush1.msra.mxu0 0.0
  %89 = vmatprep.subr.mxu0 0.0
  %90 = vmatpush1.msra.mxu0 0.0
  %91 = vmatprep.subr.mxu0 0.0
  %92 = vmatpush1.msra.mxu0 0.0
  %93 = vmatprep.subr.mxu0 0.0
  %94 = vmatpush1.msra.mxu0 0.0
  %95 = vmatprep.subr.mxu0 0.0
  %96 = vmatpush1.msra.mxu0 0.0
  %97 = vmatprep.subr.mxu0 0.0
  %98 = vmatpush1.msra.mxu0 0.0
  %99 = vmatprep.subr.mxu0 0.0
  %100 = vmatpush1.msra.mxu0 0.0
  %101 = vmatprep.subr.mxu0 0.0
  %102 = vmatpush1.msra.mxu0 0.0
  %103 = vmatprep.subr.mxu0 0.0
  %104 = vmatpush1.msra.mxu0 0.0
  %105 = vmatprep.subr.mxu0 0.0
  %106 = vmatpush1.msra.mxu0 0.0
  %107 = vmatprep.subr.mxu0 0.0
  %108 = vmatpush1.msra.mxu0 0.0
  %109 = vmatprep.subr.mxu0 0.0
  %110 = vmatpush1.msra.mxu0 0.0
  %111 = vmatprep.subr.mxu0 0.0
  %112 = vmatpush1.msra.mxu0 0.0
  %113 = vmatprep.subr.mxu0 0.0
  %114 = vmatpush1.msra.mxu0 0.0
  %115 = vmatprep.subr.mxu0 0.0
  %116 = vmatpush1.msra.mxu0 0.0
  %117 = vmatprep.subr.mxu0 0.0
  %118 = vmatpush1.msra.mxu0 0.0
  %119 = vmatprep.subr.mxu0 0.0
  %120 = vmatpush1.msra.mxu0 0.0
  %121 = vmatprep.subr.mxu0 0.0
  %122 = vmatpush1.msra.mxu0 0.0
  %123 = vmatprep.subr.mxu0 0.0
  %124 = vmatpush1.msra.mxu0 0.0
  %125 = vmatprep.subr.mxu0 0.0
  %126 = vmatpush1.msra.mxu0 0.0
  %127 = vmatprep.subr.mxu0 0.0
  %128 = vmatpush1.msra.mxu0 0.0
  %129 = vmatprep.subr.mxu0 0.0
  %130 = vmatpush1.msra.mxu0 0.0
  %131 = vmatprep.subr.mxu0 0.0
  %132 = vmatpush1.msra.mxu0 0.0
  %133 = vmatprep.subr.mxu0 0.0
  %134 = vmatpush1.msra.mxu0 0.0
  %135 = vmatprep.subr.mxu0 0.0
  %136 = vmatpush1.msra.mxu0 0.0
  %137 = vmatprep.subr.mxu0 0.0
  %138 = vmatpush1.msra.mxu0 0.0
  %139 = vmatprep.mubr.f32.mxu0 0.0
  %140 = vmatmul.mubr.f32.gmra.mrb[0].mxu0 %v70
  %v141 = vpop.f32.mrb[0].mxu0
  %v142 = vadd.f32 0.0, %v141
  %v143 = vpop.f32.mrb[0].mxu0
  %144 = vmatprep.mubr.f32.mxu0 0.0
  %145 = vmatmul.mubr.f32.gmra.mrb[0].mxu0 %v73
  %v146 = vpop.f32.mrb[0].mxu0
  %v147 = vadd.f32 0.0, %v146
  %v148 = vpop.f32.mrb[0].mxu0
  %149 = vdwg.mxu0
  %150 = vst [vmem:[%s4] sm:$0xff] %v142
  %151 = vst [vmem:[%s4 + $0x8] sm:$0xff] %v147
  // Predicated region
  $region18: #{_lambda_.17} parent=0 // pred_check
    _
  $region19: #{_lambda_.17} parent=0 // pred_check_branch
    %153 = sbr.rel (0) target = $region21
  $region20: #{_lambda_.17} parent=0 // pred_region
    _
  $region21: #{_lambda_.17} parent=0 // pred_fallthru
    _
  // Predicated region
  $region22: #{_lambda_.17} parent=0 // pred_check
    _
  $region23: #{_lambda_.17} parent=0 // pred_check_branch
    %155 = sbr.rel (0) target = $region25
  $region24: #{_lambda_.17} parent=0 // pred_region
    _
  $region25: #{_lambda_.17} parent=0 // pred_fallthru
    _

</llo_original>
